<compile_context>
chip_gen: v6e
topology: v6e:2x2x1
jax: 0.10.0
libtpu: 0.0.40
codegen_flags: <defaults>
</compile_context>

<pallas_src>
import jax
import jax.numpy as jnp
import numpy as np
from jax.experimental import pallas as pl
from jax.experimental.pallas import tpu as pltpu

# Small, self-consistent shapes (original tutorial used n_class=29, n_hidden=128).
N_CLASS = 16
N_HIDDEN = 32
BATCH = 2
ENC_LEN = 8
DEC_LEN = 8
B_PAD = 8          # pad batch to one full sublane granule
OUT_LANES = 128    # lane-dense output slab width (>= N_CLASS)


def seq2seq_kernel(acts_ref, whh_ref, fc_ref, out_ref):
    """acts_ref: [ENC_LEN*B + DEC_LEN*B + B, H]  (enc_pre | dec_pre | h0), biases folded.
       whh_ref : [2*H, H]                        (W_hh_enc | W_hh_dec)
       fc_ref  : [H + 8, OUT_LANES]              (W_fc padded | b_fc padded | zeros)
       out_ref : [DEC_LEN*B, OUT_LANES]          lane-dense output slab."""
    B = B_PAD

    # ---- One load per packed buffer (static, sublane-aligned slices) ----
    enc_pre = acts_ref[0:ENC_LEN * B, :]                          # [T_enc*B, H]
    dec_pre = acts_ref[ENC_LEN * B:(ENC_LEN + DEC_LEN) * B, :]    # [T_dec*B, H]
    h = acts_ref[(ENC_LEN + DEC_LEN) * B:(ENC_LEN + DEC_LEN) * B + B, :]   # [B, H]

    w_hh_e = whh_ref[0:N_HIDDEN, :]                               # [H, H]
    w_hh_d = whh_ref[N_HIDDEN:2 * N_HIDDEN, :]                    # [H, H]
    w_fc = fc_ref[0:N_HIDDEN, :]                                  # [H, OUT_LANES]
    b_fc = fc_ref[N_HIDDEN:N_HIDDEN + 1, :]                       # [1, OUT_LANES]

    # ---- Recurrence: hidden state carried in vregs, 1 MXU push per serial step ----
    for t in range(ENC_LEN):                                      # static unroll
        h = jnp.tanh(enc_pre[t * B:(t + 1) * B, :]
                     + jnp.dot(h, w_hh_e, preferred_element_type=jnp.float32))

    hs = []
    for t in range(DEC_LEN):
        h = jnp.tanh(dec_pre[t * B:(t + 1) * B, :]
                     + jnp.dot(h, w_hh_d, preferred_element_type=jnp.float32))
        hs.append(h)                                              # SSA-carried, no store

    # ---- Deferred FC: one matmul + one unmasked lane-dense store ----
    hs_all = jnp.concatenate(hs, axis=0)                          # [T_dec*B, H] in vregs
    out_ref[...] = (jnp.dot(hs_all, w_fc, preferred_element_type=jnp.float32)
                    + b_fc).astype(out_ref.dtype)


def init_params(key):
    """Deterministic PyTorch-style init: U(-1/sqrt(H), 1/sqrt(H))."""
    ks = jax.random.split(key, 10)
    bound = 1.0 / np.sqrt(N_HIDDEN)
    u = lambda k, shape: jax.random.uniform(k, shape, jnp.float32, -bound, bound)
    params = dict(
        # encoder RNN (stored transposed: [in, out])
        w_ih_e=u(ks[0], (N_CLASS, N_HIDDEN)),
        w_hh_e=u(ks[1], (N_HIDDEN, N_HIDDEN)),
        b_e=(u(ks[2], (1, N_HIDDEN)) + u(ks[3], (1, N_HIDDEN))),   # b_ih + b_hh
        # decoder RNN
        w_ih_d=u(ks[4], (N_CLASS, N_HIDDEN)),
        w_hh_d=u(ks[5], (N_HIDDEN, N_HIDDEN)),
        b_d=(u(ks[6], (1, N_HIDDEN)) + u(ks[7], (1, N_HIDDEN))),
        # fc layer
        w_fc=u(ks[8], (N_HIDDEN, N_CLASS)),
        b_fc=u(ks[9], (1, N_CLASS)),
    )
    return params


def _to_time_major_flat(x, b_pad):
    """[B, T, C] -> zero-pad batch to b_pad -> time-major flat [T*b_pad, C]."""
    B, T, C = x.shape
    x = jnp.pad(x, ((0, b_pad - B), (0, 0), (0, 0)))
    return jnp.transpose(x, (1, 0, 2)).reshape(T * b_pad, C)


@jax.jit
def seq2seq_forward(enc_input, enc_hidden, dec_input, params):
    """enc_input: [B, T_enc, C], enc_hidden: [1, B, H], dec_input: [B, T_dec, C]
       returns:   [T_dec, B, C]  (matches the PyTorch module's output layout)."""
    B = enc_input.shape[0]

    # Layout + hoisted input projections done by fused XLA (one-hot @ W_ih is a
    # row gather; keeps the kernel's serial prologue empty).
    enc_x = _to_time_major_flat(enc_input, B_PAD)                # [T_enc*B_PAD, C]
    dec_x = _to_time_major_flat(dec_input, B_PAD)                # [T_dec*B_PAD, C]
    h0 = jnp.pad(enc_hidden[0], ((0, B_PAD - B), (0, 0)))        # [B_PAD, H]
    enc_pre = enc_x @ params["w_ih_e"] + params["b_e"]           # [T_enc*B_PAD, H]
    dec_pre = dec_x @ params["w_ih_d"] + params["b_d"]           # [T_dec*B_PAD, H]

    # Pack kernel inputs into 3 contiguous buffers (3 entry DMAs instead of 11).
    acts = jnp.concatenate([enc_pre, dec_pre, h0], axis=0)       # [136, H]
    whh = jnp.concatenate([params["w_hh_e"], params["w_hh_d"]], axis=0)   # [2H, H]
    w_fc_pad = jnp.pad(params["w_fc"], ((0, 0), (0, OUT_LANES - N_CLASS)))
    b_fc_pad = jnp.pad(params["b_fc"], ((0, 7), (0, OUT_LANES - N_CLASS)))
    fc = jnp.concatenate([w_fc_pad, b_fc_pad], axis=0)           # [H + 8, 128]

    vmem_spec = pl.BlockSpec(memory_space=pltpu.MemorySpace.VMEM)
    out_slab = pl.pallas_call(
        seq2seq_kernel,
        out_shape=jax.ShapeDtypeStruct((DEC_LEN * B_PAD, OUT_LANES), jnp.float32),
        in_specs=[vmem_spec, vmem_spec, vmem_spec],
        out_specs=vmem_spec,
    )(acts, whh, fc)

    # [T_dec*B_PAD, 128] -> [T_dec, B, C]  (drop padded batch rows + padded lanes)
    return out_slab.reshape(DEC_LEN, B_PAD, OUT_LANES)[:, :B, :N_CLASS]


def seq2seq_reference(enc_input, enc_hidden, dec_input, params):
    """Pure-JAX reference with identical semantics (for correctness check)."""
    enc_x = jnp.transpose(enc_input, (1, 0, 2))
    dec_x = jnp.transpose(dec_input, (1, 0, 2))
    h = enc_hidden[0]
    for t in range(enc_x.shape[0]):
        h = jnp.tanh(enc_x[t] @ params["w_ih_e"] + h @ params["w_hh_e"] + params["b_e"])
    outs = []
    for t in range(dec_x.shape[0]):
        h = jnp.tanh(dec_x[t] @ params["w_ih_d"] + h @ params["w_hh_d"] + params["b_d"])
        outs.append(h @ params["w_fc"] + params["b_fc"])
    return jnp.stack(outs, axis=0)


if __name__ == "__main__":
    key = jax.random.PRNGKey(0)
    k_params, k_enc, k_dec = jax.random.split(key, 3)

    params = init_params(k_params)

    # One-hot style inputs (like the original letter one-hots), plus zero init hidden.
    enc_ids = jax.random.randint(k_enc, (BATCH, ENC_LEN), 0, N_CLASS)
    dec_ids = jax.random.randint(k_dec, (BATCH, DEC_LEN), 0, N_CLASS)
    enc_input = jax.nn.one_hot(enc_ids, N_CLASS, dtype=jnp.float32)   # [B, T_enc, C]
    dec_input = jax.nn.one_hot(dec_ids, N_CLASS, dtype=jnp.float32)   # [B, T_dec, C]
    enc_hidden = jnp.zeros((1, BATCH, N_HIDDEN), jnp.float32)         # [1, B, H]

    out = seq2seq_forward(enc_input, enc_hidden, dec_input, params)
    out = jax.block_until_ready(out)

    ref = seq2seq_reference(enc_input, enc_hidden, dec_input, params)
    assert out.shape == (DEC_LEN, BATCH, N_CLASS)
    np.testing.assert_allclose(np.asarray(out), np.asarray(ref), rtol=1e-5, atol=1e-5)

    print("KERNEL_OK")
</pallas_src>

<mosaic_0001>
module attributes {stable_mosaic.version = 11 : i64} {
  func.func @seq2seq_kernel(%arg0: memref<136x32xf32, #tpu.memory_space<vmem>>, %arg1: memref<64x32xf32, #tpu.memory_space<vmem>>, %arg2: memref<40x128xf32, #tpu.memory_space<vmem>>, %arg3: memref<64x128xf32, #tpu.memory_space<vmem>>) attributes {dimension_semantics = [], scalar_prefetch = 0 : i64, scratch_operands = 0 : i64, tpu.core_type = #tpu.core_type<tc>} {
    %c0 = arith.constant 0 : index
    %c0_0 = arith.constant 0 : index
    %0 = vector.load %arg0[%c0, %c0_0] : memref<136x32xf32, #tpu.memory_space<vmem>>, vector<64x32xf32>
    %c64 = arith.constant 64 : index
    %c0_1 = arith.constant 0 : index
    %1 = vector.load %arg0[%c64, %c0_1] : memref<136x32xf32, #tpu.memory_space<vmem>>, vector<64x32xf32>
    %c128 = arith.constant 128 : index
    %c0_2 = arith.constant 0 : index
    %2 = vector.load %arg0[%c128, %c0_2] : memref<136x32xf32, #tpu.memory_space<vmem>>, vector<8x32xf32>
    %c0_3 = arith.constant 0 : index
    %c0_4 = arith.constant 0 : index
    %3 = vector.load %arg1[%c0_3, %c0_4] : memref<64x32xf32, #tpu.memory_space<vmem>>, vector<32x32xf32>
    %c32 = arith.constant 32 : index
    %c0_5 = arith.constant 0 : index
    %4 = vector.load %arg1[%c32, %c0_5] : memref<64x32xf32, #tpu.memory_space<vmem>>, vector<32x32xf32>
    %c0_6 = arith.constant 0 : index
    %c0_7 = arith.constant 0 : index
    %5 = vector.load %arg2[%c0_6, %c0_7] : memref<40x128xf32, #tpu.memory_space<vmem>>, vector<32x128xf32>
    %c32_8 = arith.constant 32 : index
    %c0_9 = arith.constant 0 : index
    %6 = vector.load %arg2[%c32_8, %c0_9] : memref<40x128xf32, #tpu.memory_space<vmem>>, vector<1x128xf32>
    %7 = vector.extract_strided_slice %0 {offsets = [0, 0], sizes = [8, 32], strides = [1, 1]} : vector<64x32xf32> to vector<8x32xf32>
    %cst = arith.constant dense<0.000000e+00> : vector<8x32xf32>
    %8 = tpu.matmul %2, %3, %cst {dimension_numbers = #tpu.dot_dimension_numbers<[1], [0], [0], [1], [0, 0, 1, 1], [], []>} : vector<8x32xf32>, vector<32x32xf32>, vector<8x32xf32> -> vector<8x32xf32>
    %9 = arith.addf %7, %8 : vector<8x32xf32>
    %10 = math.tanh %9 : vector<8x32xf32>
    %11 = vector.extract_strided_slice %0 {offsets = [8, 0], sizes = [8, 32], strides = [1, 1]} : vector<64x32xf32> to vector<8x32xf32>
    %cst_10 = arith.constant dense<0.000000e+00> : vector<8x32xf32>
    %12 = tpu.matmul %10, %3, %cst_10 {dimension_numbers = #tpu.dot_dimension_numbers<[1], [0], [0], [1], [0, 0, 1, 1], [], []>} : vector<8x32xf32>, vector<32x32xf32>, vector<8x32xf32> -> vector<8x32xf32>
    %13 = arith.addf %11, %12 : vector<8x32xf32>
    %14 = math.tanh %13 : vector<8x32xf32>
    %15 = vector.extract_strided_slice %0 {offsets = [16, 0], sizes = [8, 32], strides = [1, 1]} : vector<64x32xf32> to vector<8x32xf32>
    %cst_11 = arith.constant dense<0.000000e+00> : vector<8x32xf32>
    %16 = tpu.matmul %14, %3, %cst_11 {dimension_numbers = #tpu.dot_dimension_numbers<[1], [0], [0], [1], [0, 0, 1, 1], [], []>} : vector<8x32xf32>, vector<32x32xf32>, vector<8x32xf32> -> vector<8x32xf32>
    %17 = arith.addf %15, %16 : vector<8x32xf32>
    %18 = math.tanh %17 : vector<8x32xf32>
    %19 = vector.extract_strided_slice %0 {offsets = [24, 0], sizes = [8, 32], strides = [1, 1]} : vector<64x32xf32> to vector<8x32xf32>
    %cst_12 = arith.constant dense<0.000000e+00> : vector<8x32xf32>
    %20 = tpu.matmul %18, %3, %cst_12 {dimension_numbers = #tpu.dot_dimension_numbers<[1], [0], [0], [1], [0, 0, 1, 1], [], []>} : vector<8x32xf32>, vector<32x32xf32>, vector<8x32xf32> -> vector<8x32xf32>
    %21 = arith.addf %19, %20 : vector<8x32xf32>
    %22 = math.tanh %21 : vector<8x32xf32>
    %23 = vector.extract_strided_slice %0 {offsets = [32, 0], sizes = [8, 32], strides = [1, 1]} : vector<64x32xf32> to vector<8x32xf32>
    %cst_13 = arith.constant dense<0.000000e+00> : vector<8x32xf32>
    %24 = tpu.matmul %22, %3, %cst_13 {dimension_numbers = #tpu.dot_dimension_numbers<[1], [0], [0], [1], [0, 0, 1, 1], [], []>} : vector<8x32xf32>, vector<32x32xf32>, vector<8x32xf32> -> vector<8x32xf32>
    %25 = arith.addf %23, %24 : vector<8x32xf32>
    %26 = math.tanh %25 : vector<8x32xf32>
    %27 = vector.extract_strided_slice %0 {offsets = [40, 0], sizes = [8, 32], strides = [1, 1]} : vector<64x32xf32> to vector<8x32xf32>
    %cst_14 = arith.constant dense<0.000000e+00> : vector<8x32xf32>
    %28 = tpu.matmul %26, %3, %cst_14 {dimension_numbers = #tpu.dot_dimension_numbers<[1], [0], [0], [1], [0, 0, 1, 1], [], []>} : vector<8x32xf32>, vector<32x32xf32>, vector<8x32xf32> -> vector<8x32xf32>
    %29 = arith.addf %27, %28 : vector<8x32xf32>
    %30 = math.tanh %29 : vector<8x32xf32>
    %31 = vector.extract_strided_slice %0 {offsets = [48, 0], sizes = [8, 32], strides = [1, 1]} : vector<64x32xf32> to vector<8x32xf32>
    %cst_15 = arith.constant dense<0.000000e+00> : vector<8x32xf32>
    %32 = tpu.matmul %30, %3, %cst_15 {dimension_numbers = #tpu.dot_dimension_numbers<[1], [0], [0], [1], [0, 0, 1, 1], [], []>} : vector<8x32xf32>, vector<32x32xf32>, vector<8x32xf32> -> vector<8x32xf32>
    %33 = arith.addf %31, %32 : vector<8x32xf32>
    %34 = math.tanh %33 : vector<8x32xf32>
    %35 = vector.extract_strided_slice %0 {offsets = [56, 0], sizes = [8, 32], strides = [1, 1]} : vector<64x32xf32> to vector<8x32xf32>
    %cst_16 = arith.constant dense<0.000000e+00> : vector<8x32xf32>
    %36 = tpu.matmul %34, %3, %cst_16 {dimension_numbers = #tpu.dot_dimension_numbers<[1], [0], [0], [1], [0, 0, 1, 1], [], []>} : vector<8x32xf32>, vector<32x32xf32>, vector<8x32xf32> -> vector<8x32xf32>
    %37 = arith.addf %35, %36 : vector<8x32xf32>
    %38 = math.tanh %37 : vector<8x32xf32>
    %39 = vector.extract_strided_slice %1 {offsets = [0, 0], sizes = [8, 32], strides = [1, 1]} : vector<64x32xf32> to vector<8x32xf32>
    %cst_17 = arith.constant dense<0.000000e+00> : vector<8x32xf32>
    %40 = tpu.matmul %38, %4, %cst_17 {dimension_numbers = #tpu.dot_dimension_numbers<[1], [0], [0], [1], [0, 0, 1, 1], [], []>} : vector<8x32xf32>, vector<32x32xf32>, vector<8x32xf32> -> vector<8x32xf32>
    %41 = arith.addf %39, %40 : vector<8x32xf32>
    %42 = math.tanh %41 : vector<8x32xf32>
    %43 = vector.extract_strided_slice %1 {offsets = [8, 0], sizes = [8, 32], strides = [1, 1]} : vector<64x32xf32> to vector<8x32xf32>
    %cst_18 = arith.constant dense<0.000000e+00> : vector<8x32xf32>
    %44 = tpu.matmul %42, %4, %cst_18 {dimension_numbers = #tpu.dot_dimension_numbers<[1], [0], [0], [1], [0, 0, 1, 1], [], []>} : vector<8x32xf32>, vector<32x32xf32>, vector<8x32xf32> -> vector<8x32xf32>
    %45 = arith.addf %43, %44 : vector<8x32xf32>
    %46 = math.tanh %45 : vector<8x32xf32>
    %47 = vector.extract_strided_slice %1 {offsets = [16, 0], sizes = [8, 32], strides = [1, 1]} : vector<64x32xf32> to vector<8x32xf32>
    %cst_19 = arith.constant dense<0.000000e+00> : vector<8x32xf32>
    %48 = tpu.matmul %46, %4, %cst_19 {dimension_numbers = #tpu.dot_dimension_numbers<[1], [0], [0], [1], [0, 0, 1, 1], [], []>} : vector<8x32xf32>, vector<32x32xf32>, vector<8x32xf32> -> vector<8x32xf32>
    %49 = arith.addf %47, %48 : vector<8x32xf32>
    %50 = math.tanh %49 : vector<8x32xf32>
    %51 = vector.extract_strided_slice %1 {offsets = [24, 0], sizes = [8, 32], strides = [1, 1]} : vector<64x32xf32> to vector<8x32xf32>
    %cst_20 = arith.constant dense<0.000000e+00> : vector<8x32xf32>
    %52 = tpu.matmul %50, %4, %cst_20 {dimension_numbers = #tpu.dot_dimension_numbers<[1], [0], [0], [1], [0, 0, 1, 1], [], []>} : vector<8x32xf32>, vector<32x32xf32>, vector<8x32xf32> -> vector<8x32xf32>
    %53 = arith.addf %51, %52 : vector<8x32xf32>
    %54 = math.tanh %53 : vector<8x32xf32>
    %55 = vector.extract_strided_slice %1 {offsets = [32, 0], sizes = [8, 32], strides = [1, 1]} : vector<64x32xf32> to vector<8x32xf32>
    %cst_21 = arith.constant dense<0.000000e+00> : vector<8x32xf32>
    %56 = tpu.matmul %54, %4, %cst_21 {dimension_numbers = #tpu.dot_dimension_numbers<[1], [0], [0], [1], [0, 0, 1, 1], [], []>} : vector<8x32xf32>, vector<32x32xf32>, vector<8x32xf32> -> vector<8x32xf32>
    %57 = arith.addf %55, %56 : vector<8x32xf32>
    %58 = math.tanh %57 : vector<8x32xf32>
    %59 = vector.extract_strided_slice %1 {offsets = [40, 0], sizes = [8, 32], strides = [1, 1]} : vector<64x32xf32> to vector<8x32xf32>
    %cst_22 = arith.constant dense<0.000000e+00> : vector<8x32xf32>
    %60 = tpu.matmul %58, %4, %cst_22 {dimension_numbers = #tpu.dot_dimension_numbers<[1], [0], [0], [1], [0, 0, 1, 1], [], []>} : vector<8x32xf32>, vector<32x32xf32>, vector<8x32xf32> -> vector<8x32xf32>
    %61 = arith.addf %59, %60 : vector<8x32xf32>
    %62 = math.tanh %61 : vector<8x32xf32>
    %63 = vector.extract_strided_slice %1 {offsets = [48, 0], sizes = [8, 32], strides = [1, 1]} : vector<64x32xf32> to vector<8x32xf32>
    %cst_23 = arith.constant dense<0.000000e+00> : vector<8x32xf32>
    %64 = tpu.matmul %62, %4, %cst_23 {dimension_numbers = #tpu.dot_dimension_numbers<[1], [0], [0], [1], [0, 0, 1, 1], [], []>} : vector<8x32xf32>, vector<32x32xf32>, vector<8x32xf32> -> vector<8x32xf32>
    %65 = arith.addf %63, %64 : vector<8x32xf32>
    %66 = math.tanh %65 : vector<8x32xf32>
    %67 = vector.extract_strided_slice %1 {offsets = [56, 0], sizes = [8, 32], strides = [1, 1]} : vector<64x32xf32> to vector<8x32xf32>
    %cst_24 = arith.constant dense<0.000000e+00> : vector<8x32xf32>
    %68 = tpu.matmul %66, %4, %cst_24 {dimension_numbers = #tpu.dot_dimension_numbers<[1], [0], [0], [1], [0, 0, 1, 1], [], []>} : vector<8x32xf32>, vector<32x32xf32>, vector<8x32xf32> -> vector<8x32xf32>
    %69 = arith.addf %67, %68 : vector<8x32xf32>
    %70 = math.tanh %69 : vector<8x32xf32>
    %71 = tpu.concatenate %42, %46, %50, %54, %58, %62, %66, %70 in 0 : vector<8x32xf32>, vector<8x32xf32>, vector<8x32xf32>, vector<8x32xf32>, vector<8x32xf32>, vector<8x32xf32>, vector<8x32xf32>, vector<8x32xf32> -> vector<64x32xf32>
    %cst_25 = arith.constant dense<0.000000e+00> : vector<64x128xf32>
    %72 = tpu.matmul %71, %5, %cst_25 {dimension_numbers = #tpu.dot_dimension_numbers<[1], [0], [0], [1], [0, 0, 1, 1], [], []>} : vector<64x32xf32>, vector<32x128xf32>, vector<64x128xf32> -> vector<64x128xf32>
    %73 = vector.broadcast %6 : vector<1x128xf32> to vector<64x128xf32>
    %74 = arith.addf %72, %73 : vector<64x128xf32>
    %c0_26 = arith.constant 0 : index
    %c0_27 = arith.constant 0 : index
    %75 = vector.load %arg3[%c0_26, %c0_27] : memref<64x128xf32, #tpu.memory_space<vmem>>, vector<64x128xf32>
    tpu.vector_store %arg3[%c0_26, %c0_27], %74 {strides = array<i32>} : memref<64x128xf32, #tpu.memory_space<vmem>>, vector<64x128xf32>,
    return
  }
}

</mosaic_0001>

<llo_original>
// kernel: seq2seq_forward.1
$region0: #{seq2seq_forward.1}
  #allocation0 [shape = 'u32[]', space=smem, size = 0x4, offset = 0x4, fixed_abs, tag = 'smem constant byte address 0x4 - core index']
  #allocation1 [shape = 'u32[144,128]{1,0:T(1,128)}', space=vmem, size = 0x12000, scoped, tag = 'internal scratch']
  %s0 = inlined_call_operand.vmem [shape: f32[136,32], index: 0, kind: input, shape index: {}]
  %s1 = inlined_call_operand.vmem [shape: f32[64,32], index: 1, kind: input, shape index: {}]
  %s2 = inlined_call_operand.vmem [shape: f32[40,128], index: 2, kind: input, shape index: {}]
  %s3 = inlined_call_operand.vmem [shape: f32[64,128], index: 3, kind: output, shape index: {}]
  %s4 = sld [smem:[#allocation0]]
  $region22: #{seq2seq_forward.1} parent=0
    _
  %s6 = ssub.s32 1, %s4
  %s7 = scalar_select 0, %s6, %s4
  // Predicated region
  $region2: #{seq2seq_forward.1} parent=0 // pred_check
    _
  $region3: #{seq2seq_forward.1} parent=0 // pred_check_branch
    %9 = sbr.rel (0) target = $region5
  $region4: #{seq2seq_forward.1} parent=0 // pred_region
    _
  $region5: #{seq2seq_forward.1} parent=0 // pred_fallthru
    _
  // Predicated region
  $region6: #{seq2seq_forward.1} parent=0 // pred_check
    _
  $region7: #{seq2seq_forward.1} parent=0 // pred_check_branch
    %11 = sbr.rel (0) target = $region9
  $region8: #{seq2seq_forward.1} parent=0 // pred_region
    _
  $region9: #{seq2seq_forward.1} parent=0 // pred_fallthru
    _
  // Predicated region
  $region10: #{seq2seq_forward.1} parent=0 // pred_check
    _
  $region11: #{seq2seq_forward.1} parent=0 // pred_check_branch
    %13 = sbr.rel (0) target = $region13
  $region12: #{seq2seq_forward.1} parent=0 // pred_region
    _
  $region13: #{seq2seq_forward.1} parent=0 // pred_fallthru
    _
  %v14 = vld [vmem:[%s0] sm:$0xff]
  %v15 = vld [vmem:[%s0 + $0x8] sm:$0xff]
  %v16 = vld [vmem:[%s0 + $0x10] sm:$0xff]
  %v17 = vld [vmem:[%s0 + $0x18] sm:$0xff]
  %v18 = vld [vmem:[%s0 + $0x20] sm:$0xff]
  %v19 = vld [vmem:[%s0 + $0x28] sm:$0xff]
  %v20 = vld [vmem:[%s0 + $0x30] sm:$0xff]
  %v21 = vld [vmem:[%s0 + $0x38] sm:$0xff]
  %v22 = vld [vmem:[%s0 + $0x40] sm:$0xff]
  %v23 = vld [vmem:[%s0 + $0x48] sm:$0xff]
  %v24 = vld [vmem:[%s0 + $0x50] sm:$0xff]
  %v25 = vld [vmem:[%s0 + $0x58] sm:$0xff]
  %v26 = vld [vmem:[%s0 + $0x60] sm:$0xff]
  %v27 = vld [vmem:[%s0 + $0x68] sm:$0xff]
  %v28 = vld [vmem:[%s0 + $0x70] sm:$0xff]
  %v29 = vld [vmem:[%s0 + $0x78] sm:$0xff]
  %v30 = vld [vmem:[%s0 + $0x80] sm:$0xff]
  %v31 = vld [vmem:[%s1] sm:$0xff]
  %v32 = vld [vmem:[%s1 + $0x8] sm:$0xff]
  %v33 = vld [vmem:[%s1 + $0x10] sm:$0xff]
  %v34 = vld [vmem:[%s1 + $0x18] sm:$0xff]
  %v35 = vld [vmem:[%s1 + $0x20] sm:$0xff]
  %v36 = vld [vmem:[%s1 + $0x28] sm:$0xff]
  %v37 = vld [vmem:[%s1 + $0x30] sm:$0xff]
  %v38 = vld [vmem:[%s1 + $0x38] sm:$0xff]
  %v39 = vld [vmem:[%s2] sm:$0xff]
  %v40 = vld [vmem:[%s2 + $0x8] sm:$0xff]
  %v41 = vld [vmem:[%s2 + $0x10] sm:$0xff]
  %v42 = vld [vmem:[%s2 + $0x18] sm:$0xff]
  %v43 = vld [vmem:[%s2 + $0x20] sm:$0x1]
  %vm44 = vcmask 261120
  %v46 = vsel %vm44, %v30, 0
  %48 = vmatprep.subr.mxu0 0.0
  %49 = vmatpush1.msra.mxu0 0.0
  %50 = vmatprep.subr.mxu0 0.0
  %51 = vmatpush1.msra.mxu0 0.0
  %52 = vmatprep.subr.mxu0 0.0
  %53 = vmatpush1.msra.mxu0 0.0
  %54 = vmatprep.subr.mxu0 0.0
  %55 = vmatpush1.msra.mxu0 0.0
  %56 = vmatprep.subr.mxu0 0.0
  %57 = vmatpush1.msra.mxu0 0.0
  %58 = vmatprep.subr.mxu0 0.0
  %59 = vmatpush1.msra.mxu0 0.0
  %60 = vmatprep.subr.mxu0 0.0
  %61 = vmatpush1.msra.mxu0 0.0
  %62 = vmatprep.subr.mxu0 0.0
  %63 = vmatpush1.msra.mxu0 0.0
  %64 = vmatprep.subr.mxu0 0.0
  %65 = vmatpush1.msra.mxu0 0.0
  %66 = vmatprep.subr.mxu0 0.0
  %67 = vmatpush1.msra.mxu0 0.0
  %68 = vmatprep.subr.mxu0 0.0
  %69 = vmatpush1.msra.mxu0 0.0
  %70 = vmatprep.subr.mxu0 0.0
  %71 = vmatpush1.msra.mxu0 0.0
  %72 = vmatprep.subr.mxu0 0.0
  %73 = vmatpush1.msra.mxu0 %v34
  %74 = vmatprep.subr.mxu0 0.0
  %75 = vmatpush1.msra.mxu0 %v33
  %76 = vmatprep.subr.mxu0 0.0
  %77 = vmatpush1.msra.mxu0 %v32
  %78 = vmatprep.subr.mxu0 0.0
  %79 = vmatpush1.msra.mxu0 %v31
  %80 = vmatprep.subr.mxu0 0.0
  %81 = vmatpush2.msra.mxu0 0.0
  %82 = vmatprep.subr.mxu0 0.0
  %83 = vmatpush2.msra.mxu0 0.0
  %84 = vmatprep.subr.mxu0 0.0
  %85 = vmatpush2.msra.mxu0 0.0
  %86 = vmatprep.subr.mxu0 0.0
  %87 = vmatpush2.msra.mxu0 0.0
  %88 = vmatprep.subr.mxu0 0.0
  %89 = vmatpush2.msra.mxu0 0.0
  %90 = vmatprep.subr.mxu0 0.0
  %91 = vmatpush2.msra.mxu0 0.0
  %92 = vmatprep.subr.mxu0 0.0
  %93 = vmatpush2.msra.mxu0 0.0
  %94 = vmatprep.subr.mxu0 0.0
  %95 = vmatpush2.msra.mxu0 0.0
  %96 = vmatprep.subr.mxu0 0.0
  %97 = vmatpush2.msra.mxu0 0.0
  %98 = vmatprep.subr.mxu0 0.0
  %99 = vmatpush2.msra.mxu0 0.0
  %100 = vmatprep.subr.mxu0 0.0
  %101 = vmatpush2.msra.mxu0 0.0
  %102 = vmatprep.subr.mxu0 0.0
  %103 = vmatpush2.msra.mxu0 0.0
  %104 = vmatprep.subr.mxu0 0.0
  %105 = vmatpush2.msra.mxu0 0.0
  %106 = vmatprep.subr.mxu0 0.0
  %107 = vmatpush2.msra.mxu0 0.0
  %108 = vmatprep.subr.mxu0 0.0
  %109 = vmatpush2.msra.mxu0 0.0
  %110 = vmatprep.subr.mxu0 0.0
  %111 = vmatpush2.msra.mxu0 0.0
  %112 = vmatprep.mubr.f32.mxu0 0.0
  %113 = vmatmul.mubr.f32.gmra.mxu0 %v46
  %v114 = vpop.f32.mrf.mxu0
  %v115 = vadd.f32 0.0, %v114
  %v116 = vpop.f32.mrf.mxu0
  %117 = vdwg.mxu0
  %v118 = vadd.f32 %v14, %v115
  %v119 = vtanh.pop %v118
  %v121 = vsel %vm44, %v119, 0
  %123 = vmatprep.subr.mxu0 0.0
  %124 = vmatpush1.msra.mxu0 0.0
  %125 = vmatprep.subr.mxu0 0.0
  %126 = vmatpush1.msra.mxu0 0.0
  %127 = vmatprep.subr.mxu0 0.0
  %128 = vmatpush1.msra.mxu0 0.0
  %129 = vmatprep.subr.mxu0 0.0
  %130 = vmatpush1.msra.mxu0 0.0
  %131 = vmatprep.subr.mxu0 0.0
  %132 = vmatpush1.msra.mxu0 0.0
  %133 = vmatprep.subr.mxu0 0.0
  %134 = vmatpush1.msra.mxu0 0.0
  %135 = vmatprep.subr.mxu0 0.0
  %136 = vmatpush1.msra.mxu0 0.0
  %137 = vmatprep.subr.mxu0 0.0
  %138 = vmatpush1.msra.mxu0 0.0
  %139 = vmatprep.subr.mxu0 0.0
  %140 = vmatpush1.msra.mxu0 0.0
  %141 = vmatprep.subr.mxu0 0.0
  %142 = vmatpush1.msra.mxu0 0.0
  %143 = vmatprep.subr.mxu0 0.0
  %144 = vmatpush1.msra.mxu0 0.0
  %145 = vmatprep.subr.mxu0 0.0
  %146 = vmatpush1.msra.mxu0 0.0
  %147 = vmatprep.subr.mxu0 0.0
  %148 = vmatpush1.msra.mxu0 %v34
  %149 = vmatprep.subr.mxu0 0.0
  %150 = vmatpush1.msra.mxu0 %v33
  %151 = vmatprep.subr.mxu0 0.0
  %152 = vmatpush1.msra.mxu0 %v32
  %153 = vmatprep.subr.mxu0 0.0
  %154 = vmatpush1.msra.mxu0 %v31
  %155 = vmatprep.subr.mxu0 0.0
  %156 = vmatpush2.msra.mxu0 0.0
  %157 = vmatprep.subr.mxu0 0.0
  %158 = vmatpush2.msra.mxu0 0.0
  %159 = vmatprep.subr.mxu0 0.0
  %160 = vmatpush2.msra.mxu0 0.0
  %161 = vmatprep.subr.mxu0 0.0
  %162 = vmatpush2.msra.mxu0 0.0
  %163 = vmatprep.subr.mxu0 0.0
  %164 = vmatpush2.msra.mxu0 0.0
  %165 = vmatprep.subr.mxu0 0.0
  %166 = vmatpush2.msra.mxu0 0.0
  %167 = vmatprep.subr.mxu0 0.0
  %168 = vmatpush2.msra.mxu0 0.0
  %169 = vmatprep.subr.mxu0 0.0
  %170 = vmatpush2.msra.mxu0 0.0
  %171 = vmatprep.subr.mxu0 0.0
  %172 = vmatpush2.msra.mxu0 0.0
  %173 = vmatprep.subr.mxu0 0.0
  %174 = vmatpush2.msra.mxu0 0.0
  %175 = vmatprep.subr.mxu0 0.0
  %176 = vmatpush2.msra.mxu0 0.0
  %177 = vmatprep.subr.mxu0 0.0
  %178 = vmatpush2.msra.mxu0 0.0
  %179 = vmatprep.subr.mxu0 0.0
  %180 = vmatpush2.msra.mxu0 0.0
  %181 = vmatprep.subr.mxu0 0.0
  %182 = vmatpush2.msra.mxu0 0.0
  %183 = vmatprep.subr.mxu0 0.0
  %184 = vmatpush2.msra.mxu0 0.0
  %185 = vmatprep.subr.mxu0 0.0
  %186 = vmatpush2.msra.mxu0 0.0
  %187 = vmatprep.mubr.f32.mxu0 0.0
  %188 = vmatmul.mubr.f32.gmra.mxu0 %v121
  %v189 = vpop.f32.mrf.mxu0
  %v190 = vadd.f32 0.0, %v189
  %v191 = vpop.f32.mrf.mxu0
  %192 = vdwg.mxu0
  %v193 = vadd.f32 %v15, %v190
  %v194 = vtanh.pop %v193
  %v196 = vsel %vm44, %v194, 0
  %198 = vmatprep.subr.mxu0 0.0
  %199 = vmatpush1.msra.mxu0 0.0
  %200 = vmatprep.subr.mxu0 0.0
  %201 = vmatpush1.msra.mxu0 0.0
  %202 = vmatprep.subr.mxu0 0.0
  %203 = vmatpush1.msra.mxu0 0.0
  %204 = vmatprep.subr.mxu0 0.0
  %205 = vmatpush1.msra.mxu0 0.0
  %206 = vmatprep.subr.mxu0 0.0
  %207 = vmatpush1.msra.mxu0 0.0
  %208 = vmatprep.subr.mxu0 0.0
  %209 = vmatpush1.msra.mxu0 0.0
  %210 = vmatprep.subr.mxu0 0.0
  %211 = vmatpush1.msra.mxu0 0.0
  %212 = vmatprep.subr.mxu0 0.0
  %213 = vmatpush1.msra.mxu0 0.0
  %214 = vmatprep.subr.mxu0 0.0
  %215 = vmatpush1.msra.mxu0 0.0
  %216 = vmatprep.subr.mxu0 0.0
  %217 = vmatpush1.msra.mxu0 0.0
  %218 = vmatprep.subr.mxu0 0.0
  %219 = vmatpush1.msra.mxu0 0.0
  %220 = vmatprep.subr.mxu0 0.0
  %221 = vmatpush1.msra.mxu0 0.0
  %222 = vmatprep.subr.mxu0 0.0
  %223 = vmatpush1.msra.mxu0 %v34
  %224 = vmatprep.subr.mxu0 0.0
  %225 = vmatpush1.msra.mxu0 %v33
  %226 = vmatprep.subr.mxu0 0.0
  %227 = vmatpush1.msra.mxu0 %v32
  %228 = vmatprep.subr.mxu0 0.0
  %229 = vmatpush1.msra.mxu0 %v31
  %230 = vmatprep.subr.mxu0 0.0
  %231 = vmatpush2.msra.mxu0 0.0
  %232 = vmatprep.subr.mxu0 0.0
  %233 = vmatpush2.msra.mxu0 0.0
  %234 = vmatprep.subr.mxu0 0.0
  %235 = vmatpush2.msra.mxu0 0.0
  %236 = vmatprep.subr.mxu0 0.0
  %237 = vmatpush2.msra.mxu0 0.0
  %238 = vmatprep.subr.mxu0 0.0
  %239 = vmatpush2.msra.mxu0 0.0
  %240 = vmatprep.subr.mxu0 0.0
  %241 = vmatpush2.msra.mxu0 0.0
  %242 = vmatprep.subr.mxu0 0.0
  %243 = vmatpush2.msra.mxu0 0.0
  %244 = vmatprep.subr.mxu0 0.0
  %245 = vmatpush2.msra.mxu0 0.0
  %246 = vmatprep.subr.mxu0 0.0
  %247 = vmatpush2.msra.mxu0 0.0
  %248 = vmatprep.subr.mxu0 0.0
  %249 = vmatpush2.msra.mxu0 0.0
  %250 = vmatprep.subr.mxu0 0.0
  %251 = vmatpush2.msra.mxu0 0.0
  %252 = vmatprep.subr.mxu0 0.0
  %253 = vmatpush2.msra.mxu0 0.0
  %254 = vmatprep.subr.mxu0 0.0
  %255 = vmatpush2.msra.mxu0 0.0
  %256 = vmatprep.subr.mxu0 0.0
  %257 = vmatpush2.msra.mxu0 0.0
  %258 = vmatprep.subr.mxu0 0.0
  %259 = vmatpush2.msra.mxu0 0.0
  %260 = vmatprep.subr.mxu0 0.0
  %261 = vmatpush2.msra.mxu0 0.0
  %262 = vmatprep.mubr.f32.mxu0 0.0
  %263 = vmatmul.mubr.f32.gmra.mxu0 %v196
  %v264 = vpop.f32.mrf.mxu0
  %v265 = vadd.f32 0.0, %v264
  %v266 = vpop.f32.mrf.mxu0
  %267 = vdwg.mxu0
  %v268 = vadd.f32 %v16, %v265
  %v269 = vtanh.pop %v268
  %v271 = vsel %vm44, %v269, 0
  %273 = vmatprep.subr.mxu0 0.0
  %274 = vmatpush1.msra.mxu0 0.0
  %275 = vmatprep.subr.mxu0 0.0
  %276 = vmatpush1.msra.mxu0 0.0
  %277 = vmatprep.subr.mxu0 0.0
  %278 = vmatpush1.msra.mxu0 0.0
  %279 = vmatprep.subr.mxu0 0.0
  %280 = vmatpush1.msra.mxu0 0.0
  %281 = vmatprep.subr.mxu0 0.0
  %282 = vmatpush1.msra.mxu0 0.0
  %283 = vmatprep.subr.mxu0 0.0
  %284 = vmatpush1.msra.mxu0 0.0
  %285 = vmatprep.subr.mxu0 0.0
  %286 = vmatpush1.msra.mxu0 0.0
  %287 = vmatprep.subr.mxu0 0.0
  %288 = vmatpush1.msra.mxu0 0.0
  %289 = vmatprep.subr.mxu0 0.0
  %290 = vmatpush1.msra.mxu0 0.0
  %291 = vmatprep.subr.mxu0 0.0
  %292 = vmatpush1.msra.mxu0 0.0
  %293 = vmatprep.subr.mxu0 0.0
  %294 = vmatpush1.msra.mxu0 0.0
  %295 = vmatprep.subr.mxu0 0.0
  %296 = vmatpush1.msra.mxu0 0.0
  %297 = vmatprep.subr.mxu0 0.0
  %298 = vmatpush1.msra.mxu0 %v34
  %299 = vmatprep.subr.mxu0 0.0
  %300 = vmatpush1.msra.mxu0 %v33
  %301 = vmatprep.subr.mxu0 0.0
  %302 = vmatpush1.msra.mxu0 %v32
  %303 = vmatprep.subr.mxu0 0.0
  %304 = vmatpush1.msra.mxu0 %v31
  %305 = vmatprep.subr.mxu0 0.0
  %306 = vmatpush2.msra.mxu0 0.0
  %307 = vmatprep.subr.mxu0 0.0
  %308 = vmatpush2.msra.mxu0 0.0
  %309 = vmatprep.subr.mxu0 0.0
  %310 = vmatpush2.msra.mxu0 0.0
  %311 = vmatprep.subr.mxu0 0.0
  %312 = vmatpush2.msra.mxu0 0.0
  %313 = vmatprep.subr.mxu0 0.0
  %314 = vmatpush2.msra.mxu0 0.0
  %315 = vmatprep.subr.mxu0 0.0
  %316 = vmatpush2.msra.mxu0 0.0
  %317 = vmatprep.subr.mxu0 0.0
  %318 = vmatpush2.msra.mxu0 0.0
  %319 = vmatprep.subr.mxu0 0.0
  %320 = vmatpush2.msra.mxu0 0.0
  %321 = vmatprep.subr.mxu0 0.0
  %322 = vmatpush2.msra.mxu0 0.0
  %323 = vmatprep.subr.mxu0 0.0
  %324 = vmatpush2.msra.mxu0 0.0
  %325 = vmatprep.subr.mxu0 0.0
  %326 = vmatpush2.msra.mxu0 0.0
  %327 = vmatprep.subr.mxu0 0.0
  %328 = vmatpush2.msra.mxu0 0.0
  %329 = vmatprep.subr.mxu0 0.0
  %330 = vmatpush2.msra.mxu0 0.0
  %331 = vmatprep.subr.mxu0 0.0
  %332 = vmatpush2.msra.mxu0 0.0
  %333 = vmatprep.subr.mxu0 0.0
  %334 = vmatpush2.msra.mxu0 0.0
  %335 = vmatprep.subr.mxu0 0.0
  %336 = vmatpush2.msra.mxu0 0.0
  %337 = vmatprep.mubr.f32.mxu0 0.0
  %338 = vmatmul.mubr.f32.gmra.mxu0 %v271
  %v339 = vpop.f32.mrf.mxu0
  %v340 = vadd.f32 0.0, %v339
  %v341 = vpop.f32.mrf.mxu0
  %342 = vdwg.mxu0
  %v343 = vadd.f32 %v17, %v340
  %v344 = vtanh.pop %v343
  %v346 = vsel %vm44, %v344, 0
  %348 = vmatprep.subr.mxu0 0.0
  %349 = vmatpush1.msra.mxu0 0.0
  %350 = vmatprep.subr.mxu0 0.0
  %351 = vmatpush1.msra.mxu0 0.0
  %352 = vmatprep.subr.mxu0 0.0
  %353 = vmatpush1.msra.mxu0 0.0
  %354 = vmatprep.subr.mxu0 0.0
  %355 = vmatpush1.msra.mxu0 0.0
  %356 = vmatprep.subr.mxu0 0.0
  %357 = vmatpush1.msra.mxu0 0.0
  %358 = vmatprep.subr.mxu0 0.0
  %359 = vmatpush1.msra.mxu0 0.0
  %360 = vmatprep.subr.mxu0 0.0
  %361 = vmatpush1.msra.mxu0 0.0
  %362 = vmatprep.subr.mxu0 0.0
  %363 = vmatpush1.msra.mxu0 0.0
  %364 = vmatprep.subr.mxu0 0.0
  %365 = vmatpush1.msra.mxu0 0.0
  %366 = vmatprep.subr.mxu0 0.0
  %367 = vmatpush1.msra.mxu0 0.0
  %368 = vmatprep.subr.mxu0 0.0
  %369 = vmatpush1.msra.mxu0 0.0
  %370 = vmatprep.subr.mxu0 0.0
  %371 = vmatpush1.msra.mxu0 0.0
  %372 = vmatprep.subr.mxu0 0.0
  %373 = vmatpush1.msra.mxu0 %v34
  %374 = vmatprep.subr.mxu0 0.0
  %375 = vmatpush1.msra.mxu0 %v33
  %376 = vmatprep.subr.mxu0 0.0
  %377 = vmatpush1.msra.mxu0 %v32
  %378 = vmatprep.subr.mxu0 0.0
  %379 = vmatpush1.msra.mxu0 %v31
  %380 = vmatprep.subr.mxu0 0.0
  %381 = vmatpush2.msra.mxu0 0.0
  %382 = vmatprep.subr.mxu0 0.0
  %383 = vmatpush2.msra.mxu0 0.0
  %384 = vmatprep.subr.mxu0 0.0
  %385 = vmatpush2.msra.mxu0 0.0
  %386 = vmatprep.subr.mxu0 0.0
  %387 = vmatpush2.msra.mxu0 0.0
  %388 = vmatprep.subr.mxu0 0.0
  %389 = vmatpush2.msra.mxu0 0.0
  %390 = vmatprep.subr.mxu0 0.0
  %391 = vmatpush2.msra.mxu0 0.0
  %392 = vmatprep.subr.mxu0 0.0
  %393 = vmatpush2.msra.mxu0 0.0
  %394 = vmatprep.subr.mxu0 0.0
  %395 = vmatpush2.msra.mxu0 0.0
  %396 = vmatprep.subr.mxu0 0.0
  %397 = vmatpush2.msra.mxu0 0.0
  %398 = vmatprep.subr.mxu0 0.0
  %399 = vmatpush2.msra.mxu0 0.0
  %400 = vmatprep.subr.mxu0 0.0
  %401 = vmatpush2.msra.mxu0 0.0
  %402 = vmatprep.subr.mxu0 0.0
  %403 = vmatpush2.msra.mxu0 0.0
  %404 = vmatprep.subr.mxu0 0.0
  %405 = vmatpush2.msra.mxu0 0.0
  %406 = vmatprep.subr.mxu0 0.0
  %407 = vmatpush2.msra.mxu0 0.0
  %408 = vmatprep.subr.mxu0 0.0
  %409 = vmatpush2.msra.mxu0 0.0
  %410 = vmatprep.subr.mxu0 0.0
  %411 = vmatpush2.msra.mxu0 0.0
  %412 = vmatprep.mubr.f32.mxu0 0.0
  %413 = vmatmul.mubr.f32.gmra.mxu0 %v346
  %v414 = vpop.f32.mrf.mxu0
  %v415 = vadd.f32 0.0, %v414
  %v416 = vpop.f32.mrf.mxu0
  %417 = vdwg.mxu0
  %v418 = vadd.f32 %v18, %v415
  %v419 = vtanh.pop %v418
  %v421 = vsel %vm44, %v419, 0
  %423 = vmatprep.subr.mxu0 0.0
  %424 = vmatpush1.msra.mxu0 0.0
  %425 = vmatprep.subr.mxu0 0.0
  %426 = vmatpush1.msra.mxu0 0.0
  %427 = vmatprep.subr.mxu0 0.0
  %428 = vmatpush1.msra.mxu0 0.0
  %429 = vmatprep.subr.mxu0 0.0
  %430 = vmatpush1.msra.mxu0 0.0
  %431 = vmatprep.subr.mxu0 0.0
  %432 = vmatpush1.msra.mxu0 0.0
  %433 = vmatprep.subr.mxu0 0.0
  %434 = vmatpush1.msra.mxu0 0.0
  %435 = vmatprep.subr.mxu0 0.0
  %436 = vmatpush1.msra.mxu0 0.0
  %437 = vmatprep.subr.mxu0 0.0
  %438 = vmatpush1.msra.mxu0 0.0
  %439 = vmatprep.subr.mxu0 0.0
  %440 = vmatpush1.msra.mxu0 0.0
  %441 = vmatprep.subr.mxu0 0.0
  %442 = vmatpush1.msra.mxu0 0.0
  %443 = vmatprep.subr.mxu0 0.0
  %444 = vmatpush1.msra.mxu0 0.0
  %445 = vmatprep.subr.mxu0 0.0
  %446 = vmatpush1.msra.mxu0 0.0
  %447 = vmatprep.subr.mxu0 0.0
  %448 = vmatpush1.msra.mxu0 %v34
  %449 = vmatprep.subr.mxu0 0.0
  %450 = vmatpush1.msra.mxu0 %v33
  %451 = vmatprep.subr.mxu0 0.0
  %452 = vmatpush1.msra.mxu0 %v32
  %453 = vmatprep.subr.mxu0 0.0
  %454 = vmatpush1.msra.mxu0 %v31
  %455 = vmatprep.subr.mxu0 0.0
  %456 = vmatpush2.msra.mxu0 0.0
  %457 = vmatprep.subr.mxu0 0.0
  %458 = vmatpush2.msra.mxu0 0.0
  %459 = vmatprep.subr.mxu0 0.0
  %460 = vmatpush2.msra.mxu0 0.0
  %461 = vmatprep.subr.mxu0 0.0
  %462 = vmatpush2.msra.mxu0 0.0
  %463 = vmatprep.subr.mxu0 0.0
  %464 = vmatpush2.msra.mxu0 0.0
  %465 = vmatprep.subr.mxu0 0.0
  %466 = vmatpush2.msra.mxu0 0.0
  %467 = vmatprep.subr.mxu0 0.0
  %468 = vmatpush2.msra.mxu0 0.0
  %469 = vmatprep.subr.mxu0 0.0
  %470 = vmatpush2.msra.mxu0 0.0
  %471 = vmatprep.subr.mxu0 0.0
  %472 = vmatpush2.msra.mxu0 0.0
  %473 = vmatprep.subr.mxu0 0.0
  %474 = vmatpush2.msra.mxu0 0.0
  %475 = vmatprep.subr.mxu0 0.0
  %476 = vmatpush2.msra.mxu0 0.0
  %477 = vmatprep.subr.mxu0 0.0
  %478 = vmatpush2.msra.mxu0 0.0
  %479 = vmatprep.subr.mxu0 0.0
  %480 = vmatpush2.msra.mxu0 0.0
  %481 = vmatprep.subr.mxu0 0.0
  %482 = vmatpush2.msra.mxu0 0.0
  %483 = vmatprep.subr.mxu0 0.0
  %484 = vmatpush2.msra.mxu0 0.0
  %485 = vmatprep.subr.mxu0 0.0
  %486 = vmatpush2.msra.mxu0 0.0
  %487 = vmatprep.mubr.f32.mxu0 0.0
  %488 = vmatmul.mubr.f32.gmra.mxu0 %v421
  %v489 = vpop.f32.mrf.mxu0
  %v490 = vadd.f32 0.0, %v489
  %v491 = vpop.f32.mrf.mxu0
  %492 = vdwg.mxu0
  %v493 = vadd.f32 %v19, %v490
  %v494 = vtanh.pop %v493
  %v496 = vsel %vm44, %v494, 0
  %498 = vmatprep.subr.mxu0 0.0
  %499 = vmatpush1.msra.mxu0 0.0
  %500 = vmatprep.subr.mxu0 0.0
  %501 = vmatpush1.msra.mxu0 0.0
  %502 = vmatprep.subr.mxu0 0.0
  %503 = vmatpush1.msra.mxu0 0.0
  %504 = vmatprep.subr.mxu0 0.0
  %505 = vmatpush1.msra.mxu0 0.0
  %506 = vmatprep.subr.mxu0 0.0
  %507 = vmatpush1.msra.mxu0 0.0
  %508 = vmatprep.subr.mxu0 0.0
  %509 = vmatpush1.msra.mxu0 0.0
  %510 = vmatprep.subr.mxu0 0.0
  %511 = vmatpush1.msra.mxu0 0.0
  %512 = vmatprep.subr.mxu0 0.0
  %513 = vmatpush1.msra.mxu0 0.0
  %514 = vmatprep.subr.mxu0 0.0
  %515 = vmatpush1.msra.mxu0 0.0
  %516 = vmatprep.subr.mxu0 0.0
  %517 = vmatpush1.msra.mxu0 0.0
  %518 = vmatprep.subr.mxu0 0.0
  %519 = vmatpush1.msra.mxu0 0.0
  %520 = vmatprep.subr.mxu0 0.0
  %521 = vmatpush1.msra.mxu0 0.0
  %522 = vmatprep.subr.mxu0 0.0
  %523 = vmatpush1.msra.mxu0 %v34
  %524 = vmatprep.subr.mxu0 0.0
  %525 = vmatpush1.msra.mxu0 %v33
  %526 = vmatprep.subr.mxu0 0.0
  %527 = vmatpush1.msra.mxu0 %v32
  %528 = vmatprep.subr.mxu0 0.0
  %529 = vmatpush1.msra.mxu0 %v31
  %530 = vmatprep.subr.mxu0 0.0
  %531 = vmatpush2.msra.mxu0 0.0
  %532 = vmatprep.subr.mxu0 0.0
  %533 = vmatpush2.msra.mxu0 0.0
  %534 = vmatprep.subr.mxu0 0.0
  %535 = vmatpush2.msra.mxu0 0.0
  %536 = vmatprep.subr.mxu0 0.0
  %537 = vmatpush2.msra.mxu0 0.0
  %538 = vmatprep.subr.mxu0 0.0
  %539 = vmatpush2.msra.mxu0 0.0
  %540 = vmatprep.subr.mxu0 0.0
  %541 = vmatpush2.msra.mxu0 0.0
  %542 = vmatprep.subr.mxu0 0.0
  %543 = vmatpush2.msra.mxu0 0.0
  %544 = vmatprep.subr.mxu0 0.0
  %545 = vmatpush2.msra.mxu0 0.0
  %546 = vmatprep.subr.mxu0 0.0
  %547 = vmatpush2.msra.mxu0 0.0
  %548 = vmatprep.subr.mxu0 0.0
  %549 = vmatpush2.msra.mxu0 0.0
  %550 = vmatprep.subr.mxu0 0.0
  %551 = vmatpush2.msra.mxu0 0.0
  %552 = vmatprep.subr.mxu0 0.0
  %553 = vmatpush2.msra.mxu0 0.0
  %554 = vmatprep.subr.mxu0 0.0
  %555 = vmatpush2.msra.mxu0 0.0
  %556 = vmatprep.subr.mxu0 0.0
  %557 = vmatpush2.msra.mxu0 0.0
  %558 = vmatprep.subr.mxu0 0.0
  %559 = vmatpush2.msra.mxu0 0.0
  %560 = vmatprep.subr.mxu0 0.0
  %561 = vmatpush2.msra.mxu0 0.0
  %562 = vmatprep.mubr.f32.mxu0 0.0
  %563 = vmatmul.mubr.f32.gmra.mxu0 %v496
  %v564 = vpop.f32.mrf.mxu0
  %v565 = vadd.f32 0.0, %v564
  %v566 = vpop.f32.mrf.mxu0
  %567 = vdwg.mxu0
  %v568 = vadd.f32 %v20, %v565
  %v569 = vtanh.pop %v568
  %v571 = vsel %vm44, %v569, 0
  %573 = vmatprep.subr.mxu0 0.0
  %574 = vmatpush1.msra.mxu0 0.0
  %575 = vmatprep.subr.mxu0 0.0
  %576 = vmatpush1.msra.mxu0 0.0
  %577 = vmatprep.subr.mxu0 0.0
  %578 = vmatpush1.msra.mxu0 0.0
  %579 = vmatprep.subr.mxu0 0.0
  %580 = vmatpush1.msra.mxu0 0.0
  %581 = vmatprep.subr.mxu0 0.0
  %582 = vmatpush1.msra.mxu0 0.0
  %583 = vmatprep.subr.mxu0 0.0
  %584 = vmatpush1.msra.mxu0 0.0
  %585 = vmatprep.subr.mxu0 0.0
  %586 = vmatpush1.msra.mxu0 0.0
  %587 = vmatprep.subr.mxu0 0.0
  %588 = vmatpush1.msra.mxu0 0.0
  %589 = vmatprep.subr.mxu0 0.0
  %590 = vmatpush1.msra.mxu0 0.0
  %591 = vmatprep.subr.mxu0 0.0
  %592 = vmatpush1.msra.mxu0 0.0
  %593 = vmatprep.subr.mxu0 0.0
  %594 = vmatpush1.msra.mxu0 0.0
  %595 = vmatprep.subr.mxu0 0.0
  %596 = vmatpush1.msra.mxu0 0.0
  %597 = vmatprep.subr.mxu0 0.0
  %598 = vmatpush1.msra.mxu0 %v34
  %599 = vmatprep.subr.mxu0 0.0
  %600 = vmatpush1.msra.mxu0 %v33
  %601 = vmatprep.subr.mxu0 0.0
  %602 = vmatpush1.msra.mxu0 %v32
  %603 = vmatprep.subr.mxu0 0.0
  %604 = vmatpush1.msra.mxu0 %v31
  %605 = vmatprep.subr.mxu0 0.0
  %606 = vmatpush2.msra.mxu0 0.0
  %607 = vmatprep.subr.mxu0 0.0
  %608 = vmatpush2.msra.mxu0 0.0
  %609 = vmatprep.subr.mxu0 0.0
  %610 = vmatpush2.msra.mxu0 0.0
  %611 = vmatprep.subr.mxu0 0.0
  %612 = vmatpush2.msra.mxu0 0.0
  %613 = vmatprep.subr.mxu0 0.0
  %614 = vmatpush2.msra.mxu0 0.0
  %615 = vmatprep.subr.mxu0 0.0
  %616 = vmatpush2.msra.mxu0 0.0
  %617 = vmatprep.subr.mxu0 0.0
  %618 = vmatpush2.msra.mxu0 0.0
  %619 = vmatprep.subr.mxu0 0.0
  %620 = vmatpush2.msra.mxu0 0.0
  %621 = vmatprep.subr.mxu0 0.0
  %622 = vmatpush2.msra.mxu0 0.0
  %623 = vmatprep.subr.mxu0 0.0
  %624 = vmatpush2.msra.mxu0 0.0
  %625 = vmatprep.subr.mxu0 0.0
  %626 = vmatpush2.msra.mxu0 0.0
  %627 = vmatprep.subr.mxu0 0.0
  %628 = vmatpush2.msra.mxu0 0.0
  %629 = vmatprep.subr.mxu0 0.0
  %630 = vmatpush2.msra.mxu0 0.0
  %631 = vmatprep.subr.mxu0 0.0
  %632 = vmatpush2.msra.mxu0 0.0
  %633 = vmatprep.subr.mxu0 0.0
  %634 = vmatpush2.msra.mxu0 0.0
  %635 = vmatprep.subr.mxu0 0.0
  %636 = vmatpush2.msra.mxu0 0.0
  %637 = vmatprep.mubr.f32.mxu0 0.0
  %638 = vmatmul.mubr.f32.gmra.mxu0 %v571
  %v639 = vpop.f32.mrf.mxu0
  %v640 = vadd.f32 0.0, %v639
  %v641 = vpop.f32.mrf.mxu0
  %642 = vdwg.mxu0
  %v643 = vadd.f32 %v21, %v640
  %v644 = vtanh.pop %v643
  %v646 = vsel %vm44, %v644, 0
  %648 = vmatprep.subr.mxu0 0.0
  %649 = vmatpush1.msra.mxu0 0.0
  %650 = vmatprep.subr.mxu0 0.0
  %651 = vmatpush1.msra.mxu0 0.0
  %652 = vmatprep.subr.mxu0 0.0
  %653 = vmatpush1.msra.mxu0 0.0
  %654 = vmatprep.subr.mxu0 0.0
  %655 = vmatpush1.msra.mxu0 0.0
  %656 = vmatprep.subr.mxu0 0.0
  %657 = vmatpush1.msra.mxu0 0.0
  %658 = vmatprep.subr.mxu0 0.0
  %659 = vmatpush1.msra.mxu0 0.0
  %660 = vmatprep.subr.mxu0 0.0
  %661 = vmatpush1.msra.mxu0 0.0
  %662 = vmatprep.subr.mxu0 0.0
  %663 = vmatpush1.msra.mxu0 0.0
  %664 = vmatprep.subr.mxu0 0.0
  %665 = vmatpush1.msra.mxu0 0.0
  %666 = vmatprep.subr.mxu0 0.0
  %667 = vmatpush1.msra.mxu0 0.0
  %668 = vmatprep.subr.mxu0 0.0
  %669 = vmatpush1.msra.mxu0 0.0
  %670 = vmatprep.subr.mxu0 0.0
  %671 = vmatpush1.msra.mxu0 0.0
  %672 = vmatprep.subr.mxu0 0.0
  %673 = vmatpush1.msra.mxu0 %v38
  %674 = vmatprep.subr.mxu0 0.0
  %675 = vmatpush1.msra.mxu0 %v37
  %676 = vmatprep.subr.mxu0 0.0
  %677 = vmatpush1.msra.mxu0 %v36
  %678 = vmatprep.subr.mxu0 0.0
  %679 = vmatpush1.msra.mxu0 %v35
  %680 = vmatprep.subr.mxu0 0.0
  %681 = vmatpush2.msra.mxu0 0.0
  %682 = vmatprep.subr.mxu0 0.0
  %683 = vmatpush2.msra.mxu0 0.0
  %684 = vmatprep.subr.mxu0 0.0
  %685 = vmatpush2.msra.mxu0 0.0
  %686 = vmatprep.subr.mxu0 0.0
  %687 = vmatpush2.msra.mxu0 0.0
  %688 = vmatprep.subr.mxu0 0.0
  %689 = vmatpush2.msra.mxu0 0.0
  %690 = vmatprep.subr.mxu0 0.0
  %691 = vmatpush2.msra.mxu0 0.0
  %692 = vmatprep.subr.mxu0 0.0
  %693 = vmatpush2.msra.mxu0 0.0
  %694 = vmatprep.subr.mxu0 0.0
  %695 = vmatpush2.msra.mxu0 0.0
  %696 = vmatprep.subr.mxu0 0.0
  %697 = vmatpush2.msra.mxu0 0.0
  %698 = vmatprep.subr.mxu0 0.0
  %699 = vmatpush2.msra.mxu0 0.0
  %700 = vmatprep.subr.mxu0 0.0
  %701 = vmatpush2.msra.mxu0 0.0
  %702 = vmatprep.subr.mxu0 0.0
  %703 = vmatpush2.msra.mxu0 0.0
  %704 = vmatprep.subr.mxu0 0.0
  %705 = vmatpush2.msra.mxu0 0.0
  %706 = vmatprep.subr.mxu0 0.0
  %707 = vmatpush2.msra.mxu0 0.0
  %708 = vmatprep.subr.mxu0 0.0
  %709 = vmatpush2.msra.mxu0 0.0
  %710 = vmatprep.subr.mxu0 0.0
  %711 = vmatpush2.msra.mxu0 0.0
  %712 = vmatprep.mubr.f32.mxu0 0.0
  %713 = vmatmul.mubr.f32.gmra.mxu0 %v646
  %v714 = vpop.f32.mrf.mxu0
  %v715 = vadd.f32 0.0, %v714
  %v716 = vpop.f32.mrf.mxu0
  %717 = vdwg.mxu0
  %v718 = vadd.f32 %v22, %v715
  %v719 = vtanh.pop %v718
  %v721 = vsel %vm44, %v719, 0
  %723 = vmatprep.subr.mxu0 0.0
  %724 = vmatpush1.msra.mxu0 0.0
  %725 = vmatprep.subr.mxu0 0.0
  %726 = vmatpush1.msra.mxu0 0.0
  %727 = vmatprep.subr.mxu0 0.0
  %728 = vmatpush1.msra.mxu0 0.0
  %729 = vmatprep.subr.mxu0 0.0
  %730 = vmatpush1.msra.mxu0 0.0
  %731 = vmatprep.subr.mxu0 0.0
  %732 = vmatpush1.msra.mxu0 0.0
  %733 = vmatprep.subr.mxu0 0.0
  %734 = vmatpush1.msra.mxu0 0.0
  %735 = vmatprep.subr.mxu0 0.0
  %736 = vmatpush1.msra.mxu0 0.0
  %737 = vmatprep.subr.mxu0 0.0
  %738 = vmatpush1.msra.mxu0 0.0
  %739 = vmatprep.subr.mxu0 0.0
  %740 = vmatpush1.msra.mxu0 0.0
  %741 = vmatprep.subr.mxu0 0.0
  %742 = vmatpush1.msra.mxu0 0.0
  %743 = vmatprep.subr.mxu0 0.0
  %744 = vmatpush1.msra.mxu0 0.0
  %745 = vmatprep.subr.mxu0 0.0
  %746 = vmatpush1.msra.mxu0 0.0
  %747 = vmatprep.subr.mxu0 0.0
  %748 = vmatpush1.msra.mxu0 %v38
  %749 = vmatprep.subr.mxu0 0.0
  %750 = vmatpush1.msra.mxu0 %v37
  %751 = vmatprep.subr.mxu0 0.0
  %752 = vmatpush1.msra.mxu0 %v36
  %753 = vmatprep.subr.mxu0 0.0
  %754 = vmatpush1.msra.mxu0 %v35
  %755 = vmatprep.subr.mxu0 0.0
  %756 = vmatpush2.msra.mxu0 0.0
  %757 = vmatprep.subr.mxu0 0.0
  %758 = vmatpush2.msra.mxu0 0.0
  %759 = vmatprep.subr.mxu0 0.0
  %760 = vmatpush2.msra.mxu0 0.0
  %761 = vmatprep.subr.mxu0 0.0
  %762 = vmatpush2.msra.mxu0 0.0
  %763 = vmatprep.subr.mxu0 0.0
  %764 = vmatpush2.msra.mxu0 0.0
  %765 = vmatprep.subr.mxu0 0.0
  %766 = vmatpush2.msra.mxu0 0.0
  %767 = vmatprep.subr.mxu0 0.0
  %768 = vmatpush2.msra.mxu0 0.0
  %769 = vmatprep.subr.mxu0 0.0
  %770 = vmatpush2.msra.mxu0 0.0
  %771 = vmatprep.subr.mxu0 0.0
  %772 = vmatpush2.msra.mxu0 0.0
  %773 = vmatprep.subr.mxu0 0.0
  %774 = vmatpush2.msra.mxu0 0.0
  %775 = vmatprep.subr.mxu0 0.0
  %776 = vmatpush2.msra.mxu0 0.0
  %777 = vmatprep.subr.mxu0 0.0
  %778 = vmatpush2.msra.mxu0 0.0
  %779 = vmatprep.subr.mxu0 0.0
  %780 = vmatpush2.msra.mxu0 0.0
  %781 = vmatprep.subr.mxu0 0.0
  %782 = vmatpush2.msra.mxu0 0.0
  %783 = vmatprep.subr.mxu0 0.0
  %784 = vmatpush2.msra.mxu0 0.0
  %785 = vmatprep.subr.mxu0 0.0
  %786 = vmatpush2.msra.mxu0 0.0
  %787 = vmatprep.mubr.f32.mxu0 0.0
  %788 = vmatmul.mubr.f32.gmra.mxu0 %v721
  %v789 = vpop.f32.mrf.mxu0
  %v790 = vadd.f32 0.0, %v789
  %v791 = vpop.f32.mrf.mxu0
  %792 = vdwg.mxu0
  %v793 = vadd.f32 %v23, %v790
  %v794 = vtanh.pop %v793
  %v796 = vsel %vm44, %v794, 0
  %798 = vmatprep.subr.mxu0 0.0
  %799 = vmatpush1.msra.mxu0 0.0
  %800 = vmatprep.subr.mxu0 0.0
  %801 = vmatpush1.msra.mxu0 0.0
  %802 = vmatprep.subr.mxu0 0.0
  %803 = vmatpush1.msra.mxu0 0.0
  %804 = vmatprep.subr.mxu0 0.0
  %805 = vmatpush1.msra.mxu0 0.0
  %806 = vmatprep.subr.mxu0 0.0
  %807 = vmatpush1.msra.mxu0 0.0
  %808 = vmatprep.subr.mxu0 0.0
  %809 = vmatpush1.msra.mxu0 0.0
  %810 = vmatprep.subr.mxu0 0.0
  %811 = vmatpush1.msra.mxu0 0.0
  %812 = vmatprep.subr.mxu0 0.0
  %813 = vmatpush1.msra.mxu0 0.0
  %814 = vmatprep.subr.mxu0 0.0
  %815 = vmatpush1.msra.mxu0 0.0
  %816 = vmatprep.subr.mxu0 0.0
  %817 = vmatpush1.msra.mxu0 0.0
  %818 = vmatprep.subr.mxu0 0.0
  %819 = vmatpush1.msra.mxu0 0.0
  %820 = vmatprep.subr.mxu0 0.0
  %821 = vmatpush1.msra.mxu0 0.0
  %822 = vmatprep.subr.mxu0 0.0
  %823 = vmatpush1.msra.mxu0 %v38
  %824 = vmatprep.subr.mxu0 0.0
  %825 = vmatpush1.msra.mxu0 %v37
  %826 = vmatprep.subr.mxu0 0.0
  %827 = vmatpush1.msra.mxu0 %v36
  %828 = vmatprep.subr.mxu0 0.0
  %829 = vmatpush1.msra.mxu0 %v35
  %830 = vmatprep.subr.mxu0 0.0
  %831 = vmatpush2.msra.mxu0 0.0
  %832 = vmatprep.subr.mxu0 0.0
  %833 = vmatpush2.msra.mxu0 0.0
  %834 = vmatprep.subr.mxu0 0.0
  %835 = vmatpush2.msra.mxu0 0.0
  %836 = vmatprep.subr.mxu0 0.0
  %837 = vmatpush2.msra.mxu0 0.0
  %838 = vmatprep.subr.mxu0 0.0
  %839 = vmatpush2.msra.mxu0 0.0
  %840 = vmatprep.subr.mxu0 0.0
  %841 = vmatpush2.msra.mxu0 0.0
  %842 = vmatprep.subr.mxu0 0.0
  %843 = vmatpush2.msra.mxu0 0.0
  %844 = vmatprep.subr.mxu0 0.0
  %845 = vmatpush2.msra.mxu0 0.0
  %846 = vmatprep.subr.mxu0 0.0
  %847 = vmatpush2.msra.mxu0 0.0
  %848 = vmatprep.subr.mxu0 0.0
  %849 = vmatpush2.msra.mxu0 0.0
  %850 = vmatprep.subr.mxu0 0.0
  %851 = vmatpush2.msra.mxu0 0.0
  %852 = vmatprep.subr.mxu0 0.0
  %853 = vmatpush2.msra.mxu0 0.0
  %854 = vmatprep.subr.mxu0 0.0
  %855 = vmatpush2.msra.mxu0 0.0
  %856 = vmatprep.subr.mxu0 0.0
  %857 = vmatpush2.msra.mxu0 0.0
  %858 = vmatprep.subr.mxu0 0.0
  %859 = vmatpush2.msra.mxu0 0.0
  %860 = vmatprep.subr.mxu0 0.0
  %861 = vmatpush2.msra.mxu0 0.0
  %862 = vmatprep.mubr.f32.mxu0 0.0
  %863 = vmatmul.mubr.f32.gmra.mxu0 %v796
  %v864 = vpop.f32.mrf.mxu0
  %v865 = vadd.f32 0.0, %v864
  %v866 = vpop.f32.mrf.mxu0
  %867 = vdwg.mxu0
  %v868 = vadd.f32 %v24, %v865
  %v869 = vtanh.pop %v868
  %v871 = vsel %vm44, %v869, 0
  %873 = vmatprep.subr.mxu0 0.0
  %874 = vmatpush1.msra.mxu0 0.0
  %875 = vmatprep.subr.mxu0 0.0
  %876 = vmatpush1.msra.mxu0 0.0
  %877 = vmatprep.subr.mxu0 0.0
  %878 = vmatpush1.msra.mxu0 0.0
  %879 = vmatprep.subr.mxu0 0.0
  %880 = vmatpush1.msra.mxu0 0.0
  %881 = vmatprep.subr.mxu0 0.0
  %882 = vmatpush1.msra.mxu0 0.0
  %883 = vmatprep.subr.mxu0 0.0
  %884 = vmatpush1.msra.mxu0 0.0
  %885 = vmatprep.subr.mxu0 0.0
  %886 = vmatpush1.msra.mxu0 0.0
  %887 = vmatprep.subr.mxu0 0.0
  %888 = vmatpush1.msra.mxu0 0.0
  %889 = vmatprep.subr.mxu0 0.0
  %890 = vmatpush1.msra.mxu0 0.0
  %891 = vmatprep.subr.mxu0 0.0
  %892 = vmatpush1.msra.mxu0 0.0
  %893 = vmatprep.subr.mxu0 0.0
  %894 = vmatpush1.msra.mxu0 0.0
  %895 = vmatprep.subr.mxu0 0.0
  %896 = vmatpush1.msra.mxu0 0.0
  %897 = vmatprep.subr.mxu0 0.0
  %898 = vmatpush1.msra.mxu0 %v38
  %899 = vmatprep.subr.mxu0 0.0
  %900 = vmatpush1.msra.mxu0 %v37
  %901 = vmatprep.subr.mxu0 0.0
  %902 = vmatpush1.msra.mxu0 %v36
  %903 = vmatprep.subr.mxu0 0.0
  %904 = vmatpush1.msra.mxu0 %v35
  %905 = vmatprep.subr.mxu0 0.0
  %906 = vmatpush2.msra.mxu0 0.0
  %907 = vmatprep.subr.mxu0 0.0
  %908 = vmatpush2.msra.mxu0 0.0
  %909 = vmatprep.subr.mxu0 0.0
  %910 = vmatpush2.msra.mxu0 0.0
  %911 = vmatprep.subr.mxu0 0.0
  %912 = vmatpush2.msra.mxu0 0.0
  %913 = vmatprep.subr.mxu0 0.0
  %914 = vmatpush2.msra.mxu0 0.0
  %915 = vmatprep.subr.mxu0 0.0
  %916 = vmatpush2.msra.mxu0 0.0
  %917 = vmatprep.subr.mxu0 0.0
  %918 = vmatpush2.msra.mxu0 0.0
  %919 = vmatprep.subr.mxu0 0.0
  %920 = vmatpush2.msra.mxu0 0.0
  %921 = vmatprep.subr.mxu0 0.0
  %922 = vmatpush2.msra.mxu0 0.0
  %923 = vmatprep.subr.mxu0 0.0
  %924 = vmatpush2.msra.mxu0 0.0
  %925 = vmatprep.subr.mxu0 0.0
  %926 = vmatpush2.msra.mxu0 0.0
  %927 = vmatprep.subr.mxu0 0.0
  %928 = vmatpush2.msra.mxu0 0.0
  %929 = vmatprep.subr.mxu0 0.0
  %930 = vmatpush2.msra.mxu0 0.0
  %931 = vmatprep.subr.mxu0 0.0
  %932 = vmatpush2.msra.mxu0 0.0
  %933 = vmatprep.subr.mxu0 0.0
  %934 = vmatpush2.msra.mxu0 0.0
  %935 = vmatprep.subr.mxu0 0.0
  %936 = vmatpush2.msra.mxu0 0.0
  %937 = vmatprep.mubr.f32.mxu0 0.0
  %938 = vmatmul.mubr.f32.gmra.mxu0 %v871
  %v939 = vpop.f32.mrf.mxu0
  %v940 = vadd.f32 0.0, %v939
  %v941 = vpop.f32.mrf.mxu0
  %942 = vdwg.mxu0
  %v943 = vadd.f32 %v25, %v940
  %v944 = vtanh.pop %v943
  %v946 = vsel %vm44, %v944, 0
  %948 = vmatprep.subr.mxu0 0.0
  %949 = vmatpush1.msra.mxu0 0.0
  %950 = vmatprep.subr.mxu0 0.0
  %951 = vmatpush1.msra.mxu0 0.0
  %952 = vmatprep.subr.mxu0 0.0
  %953 = vmatpush1.msra.mxu0 0.0
  %954 = vmatprep.subr.mxu0 0.0
  %955 = vmatpush1.msra.mxu0 0.0
  %956 = vmatprep.subr.mxu0 0.0
  %957 = vmatpush1.msra.mxu0 0.0
  %958 = vmatprep.subr.mxu0 0.0
  %959 = vmatpush1.msra.mxu0 0.0
  %960 = vmatprep.subr.mxu0 0.0
  %961 = vmatpush1.msra.mxu0 0.0
  %962 = vmatprep.subr.mxu0 0.0
  %963 = vmatpush1.msra.mxu0 0.0
  %964 = vmatprep.subr.mxu0 0.0
  %965 = vmatpush1.msra.mxu0 0.0
  %966 = vmatprep.subr.mxu0 0.0
  %967 = vmatpush1.msra.mxu0 0.0
  %968 = vmatprep.subr.mxu0 0.0
  %969 = vmatpush1.msra.mxu0 0.0
  %970 = vmatprep.subr.mxu0 0.0
  %971 = vmatpush1.msra.mxu0 0.0
  %972 = vmatprep.subr.mxu0 0.0
  %973 = vmatpush1.msra.mxu0 %v38
  %974 = vmatprep.subr.mxu0 0.0
  %975 = vmatpush1.msra.mxu0 %v37
  %976 = vmatprep.subr.mxu0 0.0
  %977 = vmatpush1.msra.mxu0 %v36
  %978 = vmatprep.subr.mxu0 0.0
  %979 = vmatpush1.msra.mxu0 %v35
  %980 = vmatprep.subr.mxu0 0.0
  %981 = vmatpush2.msra.mxu0 0.0
  %982 = vmatprep.subr.mxu0 0.0
  %983 = vmatpush2.msra.mxu0 0.0
  %984 = vmatprep.subr.mxu0 0.0
  %985 = vmatpush2.msra.mxu0 0.0
  %986 = vmatprep.subr.mxu0 0.0
  %987 = vmatpush2.msra.mxu0 0.0
  %988 = vmatprep.subr.mxu0 0.0
  %989 = vmatpush2.msra.mxu0 0.0
  %990 = vmatprep.subr.mxu0 0.0
  %991 = vmatpush2.msra.mxu0 0.0
  %992 = vmatprep.subr.mxu0 0.0
  %993 = vmatpush2.msra.mxu0 0.0
  %994 = vmatprep.subr.mxu0 0.0
  %995 = vmatpush2.msra.mxu0 0.0
  %996 = vmatprep.subr.mxu0 0.0
  %997 = vmatpush2.msra.mxu0 0.0
  %998 = vmatprep.subr.mxu0 0.0
  %999 = vmatpush2.msra.mxu0 0.0
  %1000 = vmatprep.subr.mxu0 0.0
  %1001 = vmatpush2.msra.mxu0 0.0
  %1002 = vmatprep.subr.mxu0 0.0
  %1003 = vmatpush2.msra.mxu0 0.0
  %1004 = vmatprep.subr.mxu0 0.0
  %1005 = vmatpush2.msra.mxu0 0.0
  %1006 = vmatprep.subr.mxu0 0.0
  %1007 = vmatpush2.msra.mxu0 0.0
  %1008 = vmatprep.subr.mxu0 0.0
  %1009 = vmatpush2.msra.mxu0 0.0
  %1010 = vmatprep.subr.mxu0 0.0
  %1011 = vmatpush2.msra.mxu0 0.0
  %1012 = vmatprep.mubr.f32.mxu0 0.0
  %1013 = vmatmul.mubr.f32.gmra.mxu0 %v946
  %v1014 = vpop.f32.mrf.mxu0
  %v1015 = vadd.f32 0.0, %v1014
  %v1016 = vpop.f32.mrf.mxu0
  %1017 = vdwg.mxu0
  %v1018 = vadd.f32 %v26, %v1015
  %v1019 = vtanh.pop %v1018
  %v1021 = vsel %vm44, %v1019, 0
  %1023 = vmatprep.subr.mxu0 0.0
  %1024 = vmatpush1.msra.mxu0 0.0
  %1025 = vmatprep.subr.mxu0 0.0
  %1026 = vmatpush1.msra.mxu0 0.0
  %1027 = vmatprep.subr.mxu0 0.0
  %1028 = vmatpush1.msra.mxu0 0.0
  %1029 = vmatprep.subr.mxu0 0.0
  %1030 = vmatpush1.msra.mxu0 0.0
  %1031 = vmatprep.subr.mxu0 0.0
  %1032 = vmatpush1.msra.mxu0 0.0
  %1033 = vmatprep.subr.mxu0 0.0
  %1034 = vmatpush1.msra.mxu0 0.0
  %1035 = vmatprep.subr.mxu0 0.0
  %1036 = vmatpush1.msra.mxu0 0.0
  %1037 = vmatprep.subr.mxu0 0.0
  %1038 = vmatpush1.msra.mxu0 0.0
  %1039 = vmatprep.subr.mxu0 0.0
  %1040 = vmatpush1.msra.mxu0 0.0
  %1041 = vmatprep.subr.mxu0 0.0
  %1042 = vmatpush1.msra.mxu0 0.0
  %1043 = vmatprep.subr.mxu0 0.0
  %1044 = vmatpush1.msra.mxu0 0.0
  %1045 = vmatprep.subr.mxu0 0.0
  %1046 = vmatpush1.msra.mxu0 0.0
  %1047 = vmatprep.subr.mxu0 0.0
  %1048 = vmatpush1.msra.mxu0 %v38
  %1049 = vmatprep.subr.mxu0 0.0
  %1050 = vmatpush1.msra.mxu0 %v37
  %1051 = vmatprep.subr.mxu0 0.0
  %1052 = vmatpush1.msra.mxu0 %v36
  %1053 = vmatprep.subr.mxu0 0.0
  %1054 = vmatpush1.msra.mxu0 %v35
  %1055 = vmatprep.subr.mxu0 0.0
  %1056 = vmatpush2.msra.mxu0 0.0
  %1057 = vmatprep.subr.mxu0 0.0
  %1058 = vmatpush2.msra.mxu0 0.0
  %1059 = vmatprep.subr.mxu0 0.0
  %1060 = vmatpush2.msra.mxu0 0.0
  %1061 = vmatprep.subr.mxu0 0.0
  %1062 = vmatpush2.msra.mxu0 0.0
  %1063 = vmatprep.subr.mxu0 0.0
  %1064 = vmatpush2.msra.mxu0 0.0
  %1065 = vmatprep.subr.mxu0 0.0
  %1066 = vmatpush2.msra.mxu0 0.0
  %1067 = vmatprep.subr.mxu0 0.0
  %1068 = vmatpush2.msra.mxu0 0.0
  %1069 = vmatprep.subr.mxu0 0.0
  %1070 = vmatpush2.msra.mxu0 0.0
  %1071 = vmatprep.subr.mxu0 0.0
  %1072 = vmatpush2.msra.mxu0 0.0
  %1073 = vmatprep.subr.mxu0 0.0
  %1074 = vmatpush2.msra.mxu0 0.0
  %1075 = vmatprep.subr.mxu0 0.0
  %1076 = vmatpush2.msra.mxu0 0.0
  %1077 = vmatprep.subr.mxu0 0.0
  %1078 = vmatpush2.msra.mxu0 0.0
  %1079 = vmatprep.subr.mxu0 0.0
  %1080 = vmatpush2.msra.mxu0 0.0
  %1081 = vmatprep.subr.mxu0 0.0
  %1082 = vmatpush2.msra.mxu0 0.0
  %1083 = vmatprep.subr.mxu0 0.0
  %1084 = vmatpush2.msra.mxu0 0.0
  %1085 = vmatprep.subr.mxu0 0.0
  %1086 = vmatpush2.msra.mxu0 0.0
  %1087 = vmatprep.mubr.f32.mxu0 0.0
  %1088 = vmatmul.mubr.f32.gmra.mxu0 %v1021
  %v1089 = vpop.f32.mrf.mxu0
  %v1090 = vadd.f32 0.0, %v1089
  %v1091 = vpop.f32.mrf.mxu0
  %1092 = vdwg.mxu0
  %v1093 = vadd.f32 %v27, %v1090
  %v1094 = vtanh.pop %v1093
  %v1096 = vsel %vm44, %v1094, 0
  %1098 = vmatprep.subr.mxu0 0.0
  %1099 = vmatpush1.msra.mxu0 0.0
  %1100 = vmatprep.subr.mxu0 0.0
  %1101 = vmatpush1.msra.mxu0 0.0
  %1102 = vmatprep.subr.mxu0 0.0
  %1103 = vmatpush1.msra.mxu0 0.0
  %1104 = vmatprep.subr.mxu0 0.0
  %1105 = vmatpush1.msra.mxu0 0.0
  %1106 = vmatprep.subr.mxu0 0.0
  %1107 = vmatpush1.msra.mxu0 0.0
  %1108 = vmatprep.subr.mxu0 0.0
  %1109 = vmatpush1.msra.mxu0 0.0
  %1110 = vmatprep.subr.mxu0 0.0
  %1111 = vmatpush1.msra.mxu0 0.0
  %1112 = vmatprep.subr.mxu0 0.0
  %1113 = vmatpush1.msra.mxu0 0.0
  %1114 = vmatprep.subr.mxu0 0.0
  %1115 = vmatpush1.msra.mxu0 0.0
  %1116 = vmatprep.subr.mxu0 0.0
  %1117 = vmatpush1.msra.mxu0 0.0
  %1118 = vmatprep.subr.mxu0 0.0
  %1119 = vmatpush1.msra.mxu0 0.0
  %1120 = vmatprep.subr.mxu0 0.0
  %1121 = vmatpush1.msra.mxu0 0.0
  %1122 = vmatprep.subr.mxu0 0.0
  %1123 = vmatpush1.msra.mxu0 %v38
  %1124 = vmatprep.subr.mxu0 0.0
  %1125 = vmatpush1.msra.mxu0 %v37
  %1126 = vmatprep.subr.mxu0 0.0
  %1127 = vmatpush1.msra.mxu0 %v36
  %1128 = vmatprep.subr.mxu0 0.0
  %1129 = vmatpush1.msra.mxu0 %v35
  %1130 = vmatprep.subr.mxu0 0.0
  %1131 = vmatpush2.msra.mxu0 0.0
  %1132 = vmatprep.subr.mxu0 0.0
  %1133 = vmatpush2.msra.mxu0 0.0
  %1134 = vmatprep.subr.mxu0 0.0
  %1135 = vmatpush2.msra.mxu0 0.0
  %1136 = vmatprep.subr.mxu0 0.0
  %1137 = vmatpush2.msra.mxu0 0.0
  %1138 = vmatprep.subr.mxu0 0.0
  %1139 = vmatpush2.msra.mxu0 0.0
  %1140 = vmatprep.subr.mxu0 0.0
  %1141 = vmatpush2.msra.mxu0 0.0
  %1142 = vmatprep.subr.mxu0 0.0
  %1143 = vmatpush2.msra.mxu0 0.0
  %1144 = vmatprep.subr.mxu0 0.0
  %1145 = vmatpush2.msra.mxu0 0.0
  %1146 = vmatprep.subr.mxu0 0.0
  %1147 = vmatpush2.msra.mxu0 0.0
  %1148 = vmatprep.subr.mxu0 0.0
  %1149 = vmatpush2.msra.mxu0 0.0
  %1150 = vmatprep.subr.mxu0 0.0
  %1151 = vmatpush2.msra.mxu0 0.0
  %1152 = vmatprep.subr.mxu0 0.0
  %1153 = vmatpush2.msra.mxu0 0.0
  %1154 = vmatprep.subr.mxu0 0.0
  %1155 = vmatpush2.msra.mxu0 0.0
  %1156 = vmatprep.subr.mxu0 0.0
  %1157 = vmatpush2.msra.mxu0 0.0
  %1158 = vmatprep.subr.mxu0 0.0
  %1159 = vmatpush2.msra.mxu0 0.0
  %1160 = vmatprep.subr.mxu0 0.0
  %1161 = vmatpush2.msra.mxu0 0.0
  %1162 = vmatprep.mubr.f32.mxu0 0.0
  %1163 = vmatmul.mubr.f32.gmra.mxu0 %v1096
  %v1164 = vpop.f32.mrf.mxu0
  %v1165 = vadd.f32 0.0, %v1164
  %v1166 = vpop.f32.mrf.mxu0
  %1167 = vdwg.mxu0
  %v1168 = vadd.f32 %v28, %v1165
  %v1169 = vtanh.pop %v1168
  %v1171 = vsel %vm44, %v1169, 0
  %1173 = vmatprep.subr.mxu0 0.0
  %1174 = vmatpush1.msra.mxu0 0.0
  %1175 = vmatprep.subr.mxu0 0.0
  %1176 = vmatpush1.msra.mxu0 0.0
  %1177 = vmatprep.subr.mxu0 0.0
  %1178 = vmatpush1.msra.mxu0 0.0
  %1179 = vmatprep.subr.mxu0 0.0
  %1180 = vmatpush1.msra.mxu0 0.0
  %1181 = vmatprep.subr.mxu0 0.0
  %1182 = vmatpush1.msra.mxu0 0.0
  %1183 = vmatprep.subr.mxu0 0.0
  %1184 = vmatpush1.msra.mxu0 0.0
  %1185 = vmatprep.subr.mxu0 0.0
  %1186 = vmatpush1.msra.mxu0 0.0
  %1187 = vmatprep.subr.mxu0 0.0
  %1188 = vmatpush1.msra.mxu0 0.0
  %1189 = vmatprep.subr.mxu0 0.0
  %1190 = vmatpush1.msra.mxu0 0.0
  %1191 = vmatprep.subr.mxu0 0.0
  %1192 = vmatpush1.msra.mxu0 0.0
  %1193 = vmatprep.subr.mxu0 0.0
  %1194 = vmatpush1.msra.mxu0 0.0
  %1195 = vmatprep.subr.mxu0 0.0
  %1196 = vmatpush1.msra.mxu0 0.0
  %1197 = vmatprep.subr.mxu0 0.0
  %1198 = vmatpush1.msra.mxu0 %v38
  %1199 = vmatprep.subr.mxu0 0.0
  %1200 = vmatpush1.msra.mxu0 %v37
  %1201 = vmatprep.subr.mxu0 0.0
  %1202 = vmatpush1.msra.mxu0 %v36
  %1203 = vmatprep.subr.mxu0 0.0
  %1204 = vmatpush1.msra.mxu0 %v35
  %1205 = vmatprep.subr.mxu0 0.0
  %1206 = vmatpush2.msra.mxu0 0.0
  %1207 = vmatprep.subr.mxu0 0.0
  %1208 = vmatpush2.msra.mxu0 0.0
  %1209 = vmatprep.subr.mxu0 0.0
  %1210 = vmatpush2.msra.mxu0 0.0
  %1211 = vmatprep.subr.mxu0 0.0
  %1212 = vmatpush2.msra.mxu0 0.0
  %1213 = vmatprep.subr.mxu0 0.0
  %1214 = vmatpush2.msra.mxu0 0.0
  %1215 = vmatprep.subr.mxu0 0.0
  %1216 = vmatpush2.msra.mxu0 0.0
  %1217 = vmatprep.subr.mxu0 0.0
  %1218 = vmatpush2.msra.mxu0 0.0
  %1219 = vmatprep.subr.mxu0 0.0
  %1220 = vmatpush2.msra.mxu0 0.0
  %1221 = vmatprep.subr.mxu0 0.0
  %1222 = vmatpush2.msra.mxu0 0.0
  %1223 = vmatprep.subr.mxu0 0.0
  %1224 = vmatpush2.msra.mxu0 0.0
  %1225 = vmatprep.subr.mxu0 0.0
  %1226 = vmatpush2.msra.mxu0 0.0
  %1227 = vmatprep.subr.mxu0 0.0
  %1228 = vmatpush2.msra.mxu0 0.0
  %1229 = vmatprep.subr.mxu0 0.0
  %1230 = vmatpush2.msra.mxu0 0.0
  %1231 = vmatprep.subr.mxu0 0.0
  %1232 = vmatpush2.msra.mxu0 0.0
  %1233 = vmatprep.subr.mxu0 0.0
  %1234 = vmatpush2.msra.mxu0 0.0
  %1235 = vmatprep.subr.mxu0 0.0
  %1236 = vmatpush2.msra.mxu0 0.0
  %1237 = vmatprep.mubr.f32.mxu0 0.0
  %1238 = vmatmul.mubr.f32.gmra.mxu0 %v1171
  %v1239 = vpop.f32.mrf.mxu0
  %v1240 = vadd.f32 0.0, %v1239
  %v1241 = vpop.f32.mrf.mxu0
  %1242 = vdwg.mxu0
  %v1243 = vadd.f32 %v29, %v1240
  %v1244 = vtanh.pop %v1243
  %v1245 = vlaneseq
  %v1246 = vshrl.u32 %v1245, 7
  %v1247 = vsub.s32 0, %v1246
  %v1248 = vrot.slane %v43, %v1247
  %v1250 = vsel %vm44, %v1244, 0
  %1252 = vmatprep.subr.mxu0 0.0
  %1253 = vmatpush1.msra.mxu0 0.0
  %1254 = vmatprep.subr.mxu0 0.0
  %1255 = vmatpush1.msra.mxu0 0.0
  %1256 = vmatprep.subr.mxu0 0.0
  %1257 = vmatpush1.msra.mxu0 0.0
  %1258 = vmatprep.subr.mxu0 0.0
  %1259 = vmatpush1.msra.mxu0 0.0
  %1260 = vmatprep.subr.mxu0 0.0
  %1261 = vmatpush1.msra.mxu0 0.0
  %1262 = vmatprep.subr.mxu0 0.0
  %1263 = vmatpush1.msra.mxu0 0.0
  %1264 = vmatprep.subr.mxu0 0.0
  %1265 = vmatpush1.msra.mxu0 0.0
  %1266 = vmatprep.subr.mxu0 0.0
  %1267 = vmatpush1.msra.mxu0 0.0
  %1268 = vmatprep.subr.mxu0 0.0
  %1269 = vmatpush1.msra.mxu0 0.0
  %1270 = vmatprep.subr.mxu0 0.0
  %1271 = vmatpush1.msra.mxu0 0.0
  %1272 = vmatprep.subr.mxu0 0.0
  %1273 = vmatpush1.msra.mxu0 0.0
  %1274 = vmatprep.subr.mxu0 0.0
  %1275 = vmatpush1.msra.mxu0 0.0
  %1276 = vmatprep.subr.mxu0 0.0
  %1277 = vmatpush1.msra.mxu0 %v42
  %1278 = vmatprep.subr.mxu0 0.0
  %1279 = vmatpush1.msra.mxu0 %v41
  %1280 = vmatprep.subr.mxu0 0.0
  %1281 = vmatpush1.msra.mxu0 %v40
  %1282 = vmatprep.subr.mxu0 0.0
  %1283 = vmatpush1.msra.mxu0 %v39
  %1284 = vmatprep.subr.mxu0 0.0
  %1285 = vmatpush2.msra.mxu0 0.0
  %1286 = vmatprep.subr.mxu0 0.0
  %1287 = vmatpush2.msra.mxu0 0.0
  %1288 = vmatprep.subr.mxu0 0.0
  %1289 = vmatpush2.msra.mxu0 0.0
  %1290 = vmatprep.subr.mxu0 0.0
  %1291 = vmatpush2.msra.mxu0 0.0
  %1292 = vmatprep.subr.mxu0 0.0
  %1293 = vmatpush2.msra.mxu0 0.0
  %1294 = vmatprep.subr.mxu0 0.0
  %1295 = vmatpush2.msra.mxu0 0.0
  %1296 = vmatprep.subr.mxu0 0.0
  %1297 = vmatpush2.msra.mxu0 0.0
  %1298 = vmatprep.subr.mxu0 0.0
  %1299 = vmatpush2.msra.mxu0 0.0
  %1300 = vmatprep.subr.mxu0 0.0
  %1301 = vmatpush2.msra.mxu0 0.0
  %1302 = vmatprep.subr.mxu0 0.0
  %1303 = vmatpush2.msra.mxu0 0.0
  %1304 = vmatprep.subr.mxu0 0.0
  %1305 = vmatpush2.msra.mxu0 0.0
  %1306 = vmatprep.subr.mxu0 0.0
  %1307 = vmatpush2.msra.mxu0 0.0
  %1308 = vmatprep.subr.mxu0 0.0
  %1309 = vmatpush2.msra.mxu0 0.0
  %1310 = vmatprep.subr.mxu0 0.0
  %1311 = vmatpush2.msra.mxu0 0.0
  %1312 = vmatprep.subr.mxu0 0.0
  %1313 = vmatpush2.msra.mxu0 0.0
  %1314 = vmatprep.subr.mxu0 0.0
  %1315 = vmatpush2.msra.mxu0 0.0
  %1316 = vmatprep.mubr.f32.mxu0 0.0
  %1317 = vmatmul.mubr.f32.gmra.mxu0 %v721
  %v1318 = vpop.f32.mrf.mxu0
  %v1319 = vadd.f32 %v1248, %v1318
  %v1320 = vpop.f32.mrf.mxu0
  %1321 = vmatprep.mubr.f32.mxu0 0.0
  %1322 = vmatmul.mubr.f32.gmra.mxu0 %v796
  %v1323 = vpop.f32.mrf.mxu0
  %v1324 = vadd.f32 %v1248, %v1323
  %v1325 = vpop.f32.mrf.mxu0
  %1326 = vmatprep.mubr.f32.mxu0 0.0
  %1327 = vmatmul.mubr.f32.gmra.mxu0 %v871
  %v1328 = vpop.f32.mrf.mxu0
  %v1329 = vadd.f32 %v1248, %v1328
  %v1330 = vpop.f32.mrf.mxu0
  %1331 = vmatprep.mubr.f32.mxu0 0.0
  %1332 = vmatmul.mubr.f32.gmra.mxu0 %v946
  %v1333 = vpop.f32.mrf.mxu0
  %v1334 = vadd.f32 %v1248, %v1333
  %v1335 = vpop.f32.mrf.mxu0
  %1336 = vmatprep.mubr.f32.mxu0 0.0
  %1337 = vmatmul.mubr.f32.gmra.mxu0 %v1021
  %v1338 = vpop.f32.mrf.mxu0
  %v1339 = vadd.f32 %v1248, %v1338
  %v1340 = vpop.f32.mrf.mxu0
  %1341 = vmatprep.mubr.f32.mxu0 0.0
  %1342 = vmatmul.mubr.f32.gmra.mxu0 %v1096
  %v1343 = vpop.f32.mrf.mxu0
  %v1344 = vadd.f32 %v1248, %v1343
  %v1345 = vpop.f32.mrf.mxu0
  %1346 = vmatprep.mubr.f32.mxu0 0.0
  %1347 = vmatmul.mubr.f32.gmra.mxu0 %v1171
  %v1348 = vpop.f32.mrf.mxu0
  %v1349 = vadd.f32 %v1248, %v1348
  %v1350 = vpop.f32.mrf.mxu0
  %1351 = vmatprep.mubr.f32.mxu0 0.0
  %1352 = vmatmul.mubr.f32.gmra.mxu0 %v1250
  %v1353 = vpop.f32.mrf.mxu0
  %v1354 = vadd.f32 %v1248, %v1353
  %v1355 = vpop.f32.mrf.mxu0
  %1356 = vdwg.mxu0
  %1357 = vst [vmem:[%s3] sm:$0xff] %v1319
  %1358 = vst [vmem:[%s3 + $0x8] sm:$0xff] %v1324
  %1359 = vst [vmem:[%s3 + $0x10] sm:$0xff] %v1329
  %1360 = vst [vmem:[%s3 + $0x18] sm:$0xff] %v1334
  %1361 = vst [vmem:[%s3 + $0x20] sm:$0xff] %v1339
  %1362 = vst [vmem:[%s3 + $0x28] sm:$0xff] %v1344
  %1363 = vst [vmem:[%s3 + $0x30] sm:$0xff] %v1349
  %1364 = vst [vmem:[%s3 + $0x38] sm:$0xff] %v1354
  // Predicated region
  $region14: #{seq2seq_forward.1} parent=0 // pred_check
    _
  $region15: #{seq2seq_forward.1} parent=0 // pred_check_branch
    %1366 = sbr.rel (0) target = $region17
  $region16: #{seq2seq_forward.1} parent=0 // pred_region
    _
  $region17: #{seq2seq_forward.1} parent=0 // pred_fallthru
    _
  // Predicated region
  $region18: #{seq2seq_forward.1} parent=0 // pred_check
    _
  $region19: #{seq2seq_forward.1} parent=0 // pred_check_branch
    %1368 = sbr.rel (0) target = $region21
  $region20: #{seq2seq_forward.1} parent=0 // pred_region
    _
  $region21: #{seq2seq_forward.1} parent=0 // pred_fallthru
    _

</llo_original>
